<compile_context>
chip_gen: v7x
topology: tpu7x:2x2x1
jax: 0.10.0
libtpu: 0.0.40
codegen_flags: <defaults>
</compile_context>

<pallas_src>
import math
import jax
import jax.numpy as jnp
from jax.experimental import pallas as pl
from jax.experimental.pallas import tpu as pltpu

OBS = 64           # observation_space
HID = 128          # DenseResidualBlock units
ACT = 5            # actions_amount
LOGIT_PAD = 128    # internal lane-dense padded logits width
OUT_LANES = 8      # narrow padded output width actually written to HBM
NEG_SLOPE = 0.1    # LeakyReLU(0.1)
LN_EPS = 1e-5      # nn.LayerNorm default
NEG_BIG = -1e30    # "minus infinity" for padded logits (finite, exp -> 0)

# Row layout of the packed "small" parameter array, shape (18, 128), f32:
#  0: b1_0   1: bs_0   2: b2_0   3: gamma_0   4: beta_0
#  5: b1_1   6: b2_1   7: gamma_1   8: beta_1
#  9: b1_2  10: b2_2  11: gamma_2  12: beta_2
# 13: b1_3  14: b2_3  15: gamma_3  16: beta_3
# 17: final bias, padded lanes [5:] hold NEG_BIG
N_SMALL = 18


def _leaky_relu(v):
    return jnp.where(v > 0, v, NEG_SLOPE * v)


def _layer_norm(v, gamma, beta):
    # One-pass stats: var = E[x^2] - mean^2 (clamped at 0 for rounding).
    mean = jnp.mean(v, axis=-1, keepdims=True)
    mean2 = jnp.mean(v * v, axis=-1, keepdims=True)
    var = jnp.maximum(mean2 - mean * mean, 0.0)
    return (v - mean) * jax.lax.rsqrt(var + LN_EPS) * gamma + beta


def _dot(act_f32, w_bf16):
    # bf16 MXU operands, f32 accumulation; elementwise stays f32 outside.
    return jnp.dot(act_f32.astype(jnp.bfloat16), w_bf16,
                   preferred_element_type=jnp.float32)


def policy_kernel(x_ref, w0_ref, wstk_ref, small_ref, out_ref):
    x = x_ref[...].astype(jnp.float32)            # (TB, 64)

    # ---- Block 0 (64 -> 128, Linear shortcut), fused dense1||shortcut ----
    h_full = jnp.dot(x.astype(jnp.bfloat16), w0_ref[...],
                     preferred_element_type=jnp.float32)      # (TB, 256)
    h = _leaky_relu(h_full[:, :HID] + small_ref[0:1, :])       # dense1 + b1
    sc = h_full[:, HID:] + small_ref[1:2, :]                   # shortcut + bs
    h = _leaky_relu(_dot(h, wstk_ref[0]) + small_ref[2:3, :])  # dense2 + b2
    h = _leaky_relu(h + sc)
    act = _layer_norm(h, small_ref[3:4, :], small_ref[4:5, :])

    # ---- Blocks 1..3 (128 -> 128, identity shortcut) ----
    for blk in range(3):
        wi = 1 + 2 * blk
        base = 5 + 4 * blk
        h = _leaky_relu(_dot(act, wstk_ref[wi]) + small_ref[base:base + 1, :])
        h = _leaky_relu(_dot(h, wstk_ref[wi + 1]) + small_ref[base + 1:base + 2, :])
        h = _leaky_relu(h + act)
        act = _layer_norm(h, small_ref[base + 2:base + 3, :],
                          small_ref[base + 3:base + 4, :])

    # ---- Final Linear(128, 5) padded to 128 lanes + softmax ----
    # Padded weight columns are zero; padded bias lanes are NEG_BIG, so the
    # padded logits contribute exp(...) == 0 and the softmax over 128 lanes
    # equals the softmax over the 5 real actions.  Only the first OUT_LANES
    # lanes are written back to HBM (narrow output, ~16x less write traffic).
    logits = _dot(act, wstk_ref[7]) + small_ref[17:18, :]      # (TB, 128)
    m = jnp.max(logits, axis=-1, keepdims=True)
    e = jnp.exp(logits - m)
    s = jnp.sum(e, axis=-1, keepdims=True)
    out_ref[...] = e[:, :OUT_LANES] / s                        # (TB, 8)


def init_params(key):
    """Deterministic init mirroring the PyTorch module, packed for the kernel."""

    def kaiming_uniform(k, fan_in, shape, a):
        # torch.nn.init.kaiming_uniform_: bound = sqrt(6 / ((1+a^2) * fan_in))
        bound = math.sqrt(6.0 / ((1.0 + a * a) * fan_in))
        return jax.random.uniform(k, shape, jnp.float32, -bound, bound)

    keys = jax.random.split(key, 16)
    ki = iter(range(16))

    # Block 0 weights (64 -> 128) + Linear shortcut (64 -> 128).
    w1_0 = kaiming_uniform(keys[next(ki)], OBS, (OBS, HID), NEG_SLOPE)
    w2_0 = kaiming_uniform(keys[next(ki)], HID, (HID, HID), NEG_SLOPE)
    ws_0 = kaiming_uniform(keys[next(ki)], OBS, (OBS, HID), NEG_SLOPE)

    # Blocks 1-3 weights (128 -> 128), identity shortcut.
    blk_w = []
    for _ in range(3):
        blk_w.append(kaiming_uniform(keys[next(ki)], HID, (HID, HID), NEG_SLOPE))
        blk_w.append(kaiming_uniform(keys[next(ki)], HID, (HID, HID), NEG_SLOPE))

    # Final Linear(128, 5): PyTorch default init.
    wf = kaiming_uniform(keys[next(ki)], HID, (HID, ACT), math.sqrt(5.0))
    bf_bound = 1.0 / math.sqrt(HID)
    bf = jax.random.uniform(keys[next(ki)], (ACT,), jnp.float32,
                            -bf_bound, bf_bound)

    # --- pack ---
    w0_fused = jnp.concatenate([w1_0, ws_0], axis=1).astype(jnp.bfloat16)  # (64, 256)

    wf_pad = jnp.zeros((HID, LOGIT_PAD), jnp.float32).at[:, :ACT].set(wf)
    w_stack = jnp.stack([w2_0] + blk_w + [wf_pad]).astype(jnp.bfloat16)    # (8,128,128)

    zeros = jnp.zeros((HID,), jnp.float32)
    ones = jnp.ones((HID,), jnp.float32)
    bf_row = jnp.full((LOGIT_PAD,), NEG_BIG, jnp.float32).at[:ACT].set(bf)

    rows = [zeros, zeros, zeros, ones, zeros]          # block 0: b1, bs, b2, g, be
    for _ in range(3):
        rows += [zeros, zeros, ones, zeros]            # blocks 1-3: b1, b2, g, be
    rows.append(bf_row)                                # final bias (padded)
    small = jnp.stack(rows)                            # (18, 128) f32

    return w0_fused, w_stack, small


def _round_up(n, m):
    return ((n + m - 1) // m) * m


def policy_network_forward(x, params, *, block_b=4096):
    """x: (B, 64) float32 (or bfloat16, accepted as-is) -> (B, 5) softmax probs."""
    w0_fused, w_stack, small = params
    B = x.shape[0]

    # Batch tile: multiple of 8 (f32 sublane), capped at block_b rows, and also
    # capped at ceil(B/2) so the grid has >=2 steps whenever B > 8 (lets the
    # "parallel" axis shard across both v7x TensorCores).
    TB = min(block_b, max(8, _round_up(pl.cdiv(B, 2), 8)))
    Bp = _round_up(B, TB)
    if Bp != B:
        x = jnp.pad(x, ((0, Bp - B), (0, 0)))

    grid = (pl.cdiv(Bp, TB),)

    out_padded = pl.pallas_call(
        policy_kernel,
        out_shape=jax.ShapeDtypeStruct((Bp, OUT_LANES), jnp.float32),
        grid=grid,
        in_specs=[
            pl.BlockSpec((TB, OBS), lambda i: (i, 0)),            # x: streamed
            pl.BlockSpec((OBS, 2 * HID), lambda i: (0, 0)),       # w0_fused: resident
            pl.BlockSpec((8, HID, HID), lambda i: (0, 0, 0)),     # w_stack:  resident
            pl.BlockSpec((N_SMALL, HID), lambda i: (0, 0)),       # small:    resident
        ],
        out_specs=pl.BlockSpec((TB, OUT_LANES), lambda i: (i, 0)),
        compiler_params=pltpu.CompilerParams(
            dimension_semantics=("parallel",),
            vmem_limit_bytes=64 * 1024 * 1024),
    )(x, w0_fused, w_stack, small)

    return out_padded[:B, :ACT]


def _reference_forward(x, params):
    """Pure-JAX reference (same bf16 weights, f32 accumulation)."""
    w0_fused, w_stack, small = params
    w0 = w0_fused.astype(jnp.float32)
    ws = w_stack.astype(jnp.float32)

    def ln(v, g, b):
        mean = jnp.mean(v, axis=-1, keepdims=True)
        var = jnp.mean((v - mean) ** 2, axis=-1, keepdims=True)
        return (v - mean) * jax.lax.rsqrt(var + LN_EPS) * g + b

    def lrelu(v):
        return jnp.where(v > 0, v, NEG_SLOPE * v)

    x = x.astype(jnp.float32)
    h_full = x @ w0
    h = lrelu(h_full[:, :HID] + small[0])
    sc = h_full[:, HID:] + small[1]
    h = lrelu(h @ ws[0] + small[2])
    h = lrelu(h + sc)
    act = ln(h, small[3], small[4])
    for blk in range(3):
        wi, base = 1 + 2 * blk, 5 + 4 * blk
        h = lrelu(act @ ws[wi] + small[base])
        h = lrelu(h @ ws[wi + 1] + small[base + 1])
        h = lrelu(h + act)
        act = ln(h, small[base + 2], small[base + 3])
    logits = (act @ ws[7] + small[17])[:, :ACT]
    return jax.nn.softmax(logits, axis=-1)


if __name__ == "__main__":
    key = jax.random.PRNGKey(0)
    k_params, k_x = jax.random.split(key)

    params = init_params(k_params)
    x = jax.random.normal(k_x, (8, OBS), jnp.float32)  # batch=8 observations

    probs = policy_network_forward(x, params)
    probs = jax.block_until_ready(probs)

    # sanity: shape, softmax rows sum to ~1, and match the pure-JAX reference
    assert probs.shape == (8, ACT)
    row_sums = jnp.sum(probs, axis=-1)
    assert bool(jnp.all(jnp.abs(row_sums - 1.0) < 1e-5))
    assert bool(jnp.all(probs >= 0.0))
    ref = _reference_forward(x, params)
    assert bool(jnp.all(jnp.abs(probs - ref) < 1e-2))

    # also exercise a multi-tile grid (>=2 steps) to cover the streamed path
    x_big = jax.random.normal(jax.random.PRNGKey(1), (64, OBS), jnp.float32)
    probs_big = jax.block_until_ready(
        policy_network_forward(x_big, params, block_b=16))
    ref_big = _reference_forward(x_big, params)
    assert probs_big.shape == (64, ACT)
    assert bool(jnp.all(jnp.abs(probs_big - ref_big) < 1e-2))

    print("KERNEL_OK")
</pallas_src>

<mosaic_0001>
module attributes {stable_mosaic.version = 11 : i64} {
  func.func @policy_kernel(%arg0: i32, %arg1: memref<8x64xf32, #tpu.memory_space<vmem>>, %arg2: memref<64x256xbf16, #tpu.memory_space<vmem>>, %arg3: memref<8x128x128xbf16, #tpu.memory_space<vmem>>, %arg4: memref<18x128xf32, #tpu.memory_space<vmem>>, %arg5: memref<8x8xf32, #tpu.memory_space<vmem>>) attributes {dimension_semantics = [#tpu.dimension_semantics<parallel>], iteration_bounds = array<i64: 1>, scalar_prefetch = 0 : i64, scratch_operands = 0 : i64, tpu.core_type = #tpu.core_type<tc>, window_params = [{transform_indices = @transform_0, window_bounds = array<i64: 8, 64>}, {pipeline_mode = #tpu.pipeline_mode<synchronous>, transform_indices = @transform_1, window_bounds = array<i64: 64, 256>}, {pipeline_mode = #tpu.pipeline_mode<synchronous>, transform_indices = @transform_2, window_bounds = array<i64: 8, 128, 128>}, {pipeline_mode = #tpu.pipeline_mode<synchronous>, transform_indices = @transform_3, window_bounds = array<i64: 18, 128>}, {transform_indices = @transform_4, window_bounds = array<i64: 8, 8>}]} {
    %c0 = arith.constant 0 : index
    %c0_0 = arith.constant 0 : index
    %0 = vector.load %arg1[%c0, %c0_0] : memref<8x64xf32, #tpu.memory_space<vmem>>, vector<8x64xf32>
    %1 = arith.truncf %0 : vector<8x64xf32> to vector<8x64xbf16>
    %c0_1 = arith.constant 0 : index
    %c0_2 = arith.constant 0 : index
    %2 = vector.load %arg2[%c0_1, %c0_2] : memref<64x256xbf16, #tpu.memory_space<vmem>>, vector<64x256xbf16>
    %cst = arith.constant dense<0.000000e+00> : vector<8x256xf32>
    %3 = tpu.matmul %1, %2, %cst {dimension_numbers = #tpu.dot_dimension_numbers<[1], [0], [0], [1], [0, 0, 1, 1], [], []>} : vector<8x64xbf16>, vector<64x256xbf16>, vector<8x256xf32> -> vector<8x256xf32>
    %4 = vector.extract_strided_slice %3 {offsets = [0, 0], sizes = [8, 128], strides = [1, 1]} : vector<8x256xf32> to vector<8x128xf32>
    %c0_3 = arith.constant 0 : index
    %c0_4 = arith.constant 0 : index
    %5 = vector.load %arg4[%c0_3, %c0_4] : memref<18x128xf32, #tpu.memory_space<vmem>>, vector<1x128xf32>
    %6 = vector.broadcast %5 : vector<1x128xf32> to vector<8x128xf32>
    %7 = arith.addf %4, %6 : vector<8x128xf32>
    %cst_5 = arith.constant 0.000000e+00 : f32
    %8 = vector.broadcast %cst_5 : f32 to vector<8x128xf32>
    %9 = arith.cmpf ogt, %7, %8 : vector<8x128xf32>
    %cst_6 = arith.constant 1.000000e-01 : f32
    %10 = vector.broadcast %cst_6 : f32 to vector<8x128xf32>
    %11 = arith.mulf %10, %7 : vector<8x128xf32>
    %12 = arith.select %9, %7, %11 : vector<8x128xi1>, vector<8x128xf32>
    %13 = vector.extract_strided_slice %3 {offsets = [0, 128], sizes = [8, 128], strides = [1, 1]} : vector<8x256xf32> to vector<8x128xf32>
    %c1 = arith.constant 1 : index
    %c0_7 = arith.constant 0 : index
    %14 = vector.load %arg4[%c1, %c0_7] : memref<18x128xf32, #tpu.memory_space<vmem>>, vector<1x128xf32>
    %15 = vector.broadcast %14 : vector<1x128xf32> to vector<8x128xf32>
    %16 = arith.addf %13, %15 : vector<8x128xf32>
    %c0_8 = arith.constant 0 : index
    %c0_9 = arith.constant 0 : index
    %c0_10 = arith.constant 0 : index
    %17 = vector.load %arg3[%c0_8, %c0_9, %c0_10] : memref<8x128x128xbf16, #tpu.memory_space<vmem>>, vector<1x128x128xbf16>
    %18 = vector.shape_cast %17 : vector<1x128x128xbf16> to vector<128x128xbf16>
    %19 = arith.truncf %12 : vector<8x128xf32> to vector<8x128xbf16>
    %cst_11 = arith.constant dense<0.000000e+00> : vector<8x128xf32>
    %20 = tpu.matmul %19, %18, %cst_11 {dimension_numbers = #tpu.dot_dimension_numbers<[1], [0], [0], [1], [0, 0, 1, 1], [], []>} : vector<8x128xbf16>, vector<128x128xbf16>, vector<8x128xf32> -> vector<8x128xf32>
    %c2 = arith.constant 2 : index
    %c0_12 = arith.constant 0 : index
    %21 = vector.load %arg4[%c2, %c0_12] : memref<18x128xf32, #tpu.memory_space<vmem>>, vector<1x128xf32>
    %22 = vector.broadcast %21 : vector<1x128xf32> to vector<8x128xf32>
    %23 = arith.addf %20, %22 : vector<8x128xf32>
    %cst_13 = arith.constant 0.000000e+00 : f32
    %24 = vector.broadcast %cst_13 : f32 to vector<8x128xf32>
    %25 = arith.cmpf ogt, %23, %24 : vector<8x128xf32>
    %cst_14 = arith.constant 1.000000e-01 : f32
    %26 = vector.broadcast %cst_14 : f32 to vector<8x128xf32>
    %27 = arith.mulf %26, %23 : vector<8x128xf32>
    %28 = arith.select %25, %23, %27 : vector<8x128xi1>, vector<8x128xf32>
    %29 = arith.addf %28, %16 : vector<8x128xf32>
    %cst_15 = arith.constant 0.000000e+00 : f32
    %30 = vector.broadcast %cst_15 : f32 to vector<8x128xf32>
    %31 = arith.cmpf ogt, %29, %30 : vector<8x128xf32>
    %cst_16 = arith.constant 1.000000e-01 : f32
    %32 = vector.broadcast %cst_16 : f32 to vector<8x128xf32>
    %33 = arith.mulf %32, %29 : vector<8x128xf32>
    %34 = arith.select %31, %29, %33 : vector<8x128xi1>, vector<8x128xf32>
    %c3 = arith.constant 3 : index
    %c0_17 = arith.constant 0 : index
    %35 = vector.load %arg4[%c3, %c0_17] : memref<18x128xf32, #tpu.memory_space<vmem>>, vector<1x128xf32>
    %c4 = arith.constant 4 : index
    %c0_18 = arith.constant 0 : index
    %36 = vector.load %arg4[%c4, %c0_18] : memref<18x128xf32, #tpu.memory_space<vmem>>, vector<1x128xf32>
    %cst_19 = arith.constant dense<0.000000e+00> : vector<8xf32>
    %37 = vector.multi_reduction <add>, %34, %cst_19 [1] : vector<8x128xf32> to vector<8xf32>
    %38 = vector.shape_cast %37 : vector<8xf32> to vector<8x1xf32>
    %cst_20 = arith.constant 1.280000e+02 : f32
    %39 = vector.broadcast %cst_20 : f32 to vector<8x1xf32>
    %40 = arith.divf %38, %39 : vector<8x1xf32>
    %41 = arith.mulf %34, %34 : vector<8x128xf32>
    %cst_21 = arith.constant dense<0.000000e+00> : vector<8xf32>
    %42 = vector.multi_reduction <add>, %41, %cst_21 [1] : vector<8x128xf32> to vector<8xf32>
    %43 = vector.shape_cast %42 : vector<8xf32> to vector<8x1xf32>
    %cst_22 = arith.constant 1.280000e+02 : f32
    %44 = vector.broadcast %cst_22 : f32 to vector<8x1xf32>
    %45 = arith.divf %43, %44 : vector<8x1xf32>
    %46 = arith.mulf %40, %40 : vector<8x1xf32>
    %47 = arith.subf %45, %46 : vector<8x1xf32>
    %cst_23 = arith.constant 0.000000e+00 : f32
    %48 = vector.broadcast %cst_23 : f32 to vector<8x1xf32>
    %49 = arith.maximumf %47, %48 : vector<8x1xf32>
    %50 = vector.broadcast %40 : vector<8x1xf32> to vector<8x128xf32>
    %51 = arith.subf %34, %50 : vector<8x128xf32>
    %cst_24 = arith.constant 9.99999974E-6 : f32
    %52 = vector.broadcast %cst_24 : f32 to vector<8x1xf32>
    %53 = arith.addf %49, %52 : vector<8x1xf32>
    %54 = math.rsqrt %53 : vector<8x1xf32>
    %55 = vector.broadcast %54 : vector<8x1xf32> to vector<8x128xf32>
    %56 = arith.mulf %51, %55 : vector<8x128xf32>
    %57 = vector.broadcast %35 : vector<1x128xf32> to vector<8x128xf32>
    %58 = arith.mulf %56, %57 : vector<8x128xf32>
    %59 = vector.broadcast %36 : vector<1x128xf32> to vector<8x128xf32>
    %60 = arith.addf %58, %59 : vector<8x128xf32>
    %c1_25 = arith.constant 1 : index
    %c0_26 = arith.constant 0 : index
    %c0_27 = arith.constant 0 : index
    %61 = vector.load %arg3[%c1_25, %c0_26, %c0_27] : memref<8x128x128xbf16, #tpu.memory_space<vmem>>, vector<1x128x128xbf16>
    %62 = vector.shape_cast %61 : vector<1x128x128xbf16> to vector<128x128xbf16>
    %63 = arith.truncf %60 : vector<8x128xf32> to vector<8x128xbf16>
    %cst_28 = arith.constant dense<0.000000e+00> : vector<8x128xf32>
    %64 = tpu.matmul %63, %62, %cst_28 {dimension_numbers = #tpu.dot_dimension_numbers<[1], [0], [0], [1], [0, 0, 1, 1], [], []>} : vector<8x128xbf16>, vector<128x128xbf16>, vector<8x128xf32> -> vector<8x128xf32>
    %c5 = arith.constant 5 : index
    %c0_29 = arith.constant 0 : index
    %65 = vector.load %arg4[%c5, %c0_29] : memref<18x128xf32, #tpu.memory_space<vmem>>, vector<1x128xf32>
    %66 = vector.broadcast %65 : vector<1x128xf32> to vector<8x128xf32>
    %67 = arith.addf %64, %66 : vector<8x128xf32>
    %cst_30 = arith.constant 0.000000e+00 : f32
    %68 = vector.broadcast %cst_30 : f32 to vector<8x128xf32>
    %69 = arith.cmpf ogt, %67, %68 : vector<8x128xf32>
    %cst_31 = arith.constant 1.000000e-01 : f32
    %70 = vector.broadcast %cst_31 : f32 to vector<8x128xf32>
    %71 = arith.mulf %70, %67 : vector<8x128xf32>
    %72 = arith.select %69, %67, %71 : vector<8x128xi1>, vector<8x128xf32>
    %c2_32 = arith.constant 2 : index
    %c0_33 = arith.constant 0 : index
    %c0_34 = arith.constant 0 : index
    %73 = vector.load %arg3[%c2_32, %c0_33, %c0_34] : memref<8x128x128xbf16, #tpu.memory_space<vmem>>, vector<1x128x128xbf16>
    %74 = vector.shape_cast %73 : vector<1x128x128xbf16> to vector<128x128xbf16>
    %75 = arith.truncf %72 : vector<8x128xf32> to vector<8x128xbf16>
    %cst_35 = arith.constant dense<0.000000e+00> : vector<8x128xf32>
    %76 = tpu.matmul %75, %74, %cst_35 {dimension_numbers = #tpu.dot_dimension_numbers<[1], [0], [0], [1], [0, 0, 1, 1], [], []>} : vector<8x128xbf16>, vector<128x128xbf16>, vector<8x128xf32> -> vector<8x128xf32>
    %c6 = arith.constant 6 : index
    %c0_36 = arith.constant 0 : index
    %77 = vector.load %arg4[%c6, %c0_36] : memref<18x128xf32, #tpu.memory_space<vmem>>, vector<1x128xf32>
    %78 = vector.broadcast %77 : vector<1x128xf32> to vector<8x128xf32>
    %79 = arith.addf %76, %78 : vector<8x128xf32>
    %cst_37 = arith.constant 0.000000e+00 : f32
    %80 = vector.broadcast %cst_37 : f32 to vector<8x128xf32>
    %81 = arith.cmpf ogt, %79, %80 : vector<8x128xf32>
    %cst_38 = arith.constant 1.000000e-01 : f32
    %82 = vector.broadcast %cst_38 : f32 to vector<8x128xf32>
    %83 = arith.mulf %82, %79 : vector<8x128xf32>
    %84 = arith.select %81, %79, %83 : vector<8x128xi1>, vector<8x128xf32>
    %85 = arith.addf %84, %60 : vector<8x128xf32>
    %cst_39 = arith.constant 0.000000e+00 : f32
    %86 = vector.broadcast %cst_39 : f32 to vector<8x128xf32>
    %87 = arith.cmpf ogt, %85, %86 : vector<8x128xf32>
    %cst_40 = arith.constant 1.000000e-01 : f32
    %88 = vector.broadcast %cst_40 : f32 to vector<8x128xf32>
    %89 = arith.mulf %88, %85 : vector<8x128xf32>
    %90 = arith.select %87, %85, %89 : vector<8x128xi1>, vector<8x128xf32>
    %c7 = arith.constant 7 : index
    %c0_41 = arith.constant 0 : index
    %91 = vector.load %arg4[%c7, %c0_41] : memref<18x128xf32, #tpu.memory_space<vmem>>, vector<1x128xf32>
    %c8 = arith.constant 8 : index
    %c0_42 = arith.constant 0 : index
    %92 = vector.load %arg4[%c8, %c0_42] : memref<18x128xf32, #tpu.memory_space<vmem>>, vector<1x128xf32>
    %cst_43 = arith.constant dense<0.000000e+00> : vector<8xf32>
    %93 = vector.multi_reduction <add>, %90, %cst_43 [1] : vector<8x128xf32> to vector<8xf32>
    %94 = vector.shape_cast %93 : vector<8xf32> to vector<8x1xf32>
    %cst_44 = arith.constant 1.280000e+02 : f32
    %95 = vector.broadcast %cst_44 : f32 to vector<8x1xf32>
    %96 = arith.divf %94, %95 : vector<8x1xf32>
    %97 = arith.mulf %90, %90 : vector<8x128xf32>
    %cst_45 = arith.constant dense<0.000000e+00> : vector<8xf32>
    %98 = vector.multi_reduction <add>, %97, %cst_45 [1] : vector<8x128xf32> to vector<8xf32>
    %99 = vector.shape_cast %98 : vector<8xf32> to vector<8x1xf32>
    %cst_46 = arith.constant 1.280000e+02 : f32
    %100 = vector.broadcast %cst_46 : f32 to vector<8x1xf32>
    %101 = arith.divf %99, %100 : vector<8x1xf32>
    %102 = arith.mulf %96, %96 : vector<8x1xf32>
    %103 = arith.subf %101, %102 : vector<8x1xf32>
    %cst_47 = arith.constant 0.000000e+00 : f32
    %104 = vector.broadcast %cst_47 : f32 to vector<8x1xf32>
    %105 = arith.maximumf %103, %104 : vector<8x1xf32>
    %106 = vector.broadcast %96 : vector<8x1xf32> to vector<8x128xf32>
    %107 = arith.subf %90, %106 : vector<8x128xf32>
    %cst_48 = arith.constant 9.99999974E-6 : f32
    %108 = vector.broadcast %cst_48 : f32 to vector<8x1xf32>
    %109 = arith.addf %105, %108 : vector<8x1xf32>
    %110 = math.rsqrt %109 : vector<8x1xf32>
    %111 = vector.broadcast %110 : vector<8x1xf32> to vector<8x128xf32>
    %112 = arith.mulf %107, %111 : vector<8x128xf32>
    %113 = vector.broadcast %91 : vector<1x128xf32> to vector<8x128xf32>
    %114 = arith.mulf %112, %113 : vector<8x128xf32>
    %115 = vector.broadcast %92 : vector<1x128xf32> to vector<8x128xf32>
    %116 = arith.addf %114, %115 : vector<8x128xf32>
    %c3_49 = arith.constant 3 : index
    %c0_50 = arith.constant 0 : index
    %c0_51 = arith.constant 0 : index
    %117 = vector.load %arg3[%c3_49, %c0_50, %c0_51] : memref<8x128x128xbf16, #tpu.memory_space<vmem>>, vector<1x128x128xbf16>
    %118 = vector.shape_cast %117 : vector<1x128x128xbf16> to vector<128x128xbf16>
    %119 = arith.truncf %116 : vector<8x128xf32> to vector<8x128xbf16>
    %cst_52 = arith.constant dense<0.000000e+00> : vector<8x128xf32>
    %120 = tpu.matmul %119, %118, %cst_52 {dimension_numbers = #tpu.dot_dimension_numbers<[1], [0], [0], [1], [0, 0, 1, 1], [], []>} : vector<8x128xbf16>, vector<128x128xbf16>, vector<8x128xf32> -> vector<8x128xf32>
    %c9 = arith.constant 9 : index
    %c0_53 = arith.constant 0 : index
    %121 = vector.load %arg4[%c9, %c0_53] : memref<18x128xf32, #tpu.memory_space<vmem>>, vector<1x128xf32>
    %122 = vector.broadcast %121 : vector<1x128xf32> to vector<8x128xf32>
    %123 = arith.addf %120, %122 : vector<8x128xf32>
    %cst_54 = arith.constant 0.000000e+00 : f32
    %124 = vector.broadcast %cst_54 : f32 to vector<8x128xf32>
    %125 = arith.cmpf ogt, %123, %124 : vector<8x128xf32>
    %cst_55 = arith.constant 1.000000e-01 : f32
    %126 = vector.broadcast %cst_55 : f32 to vector<8x128xf32>
    %127 = arith.mulf %126, %123 : vector<8x128xf32>
    %128 = arith.select %125, %123, %127 : vector<8x128xi1>, vector<8x128xf32>
    %c4_56 = arith.constant 4 : index
    %c0_57 = arith.constant 0 : index
    %c0_58 = arith.constant 0 : index
    %129 = vector.load %arg3[%c4_56, %c0_57, %c0_58] : memref<8x128x128xbf16, #tpu.memory_space<vmem>>, vector<1x128x128xbf16>
    %130 = vector.shape_cast %129 : vector<1x128x128xbf16> to vector<128x128xbf16>
    %131 = arith.truncf %128 : vector<8x128xf32> to vector<8x128xbf16>
    %cst_59 = arith.constant dense<0.000000e+00> : vector<8x128xf32>
    %132 = tpu.matmul %131, %130, %cst_59 {dimension_numbers = #tpu.dot_dimension_numbers<[1], [0], [0], [1], [0, 0, 1, 1], [], []>} : vector<8x128xbf16>, vector<128x128xbf16>, vector<8x128xf32> -> vector<8x128xf32>
    %c10 = arith.constant 10 : index
    %c0_60 = arith.constant 0 : index
    %133 = vector.load %arg4[%c10, %c0_60] : memref<18x128xf32, #tpu.memory_space<vmem>>, vector<1x128xf32>
    %134 = vector.broadcast %133 : vector<1x128xf32> to vector<8x128xf32>
    %135 = arith.addf %132, %134 : vector<8x128xf32>
    %cst_61 = arith.constant 0.000000e+00 : f32
    %136 = vector.broadcast %cst_61 : f32 to vector<8x128xf32>
    %137 = arith.cmpf ogt, %135, %136 : vector<8x128xf32>
    %cst_62 = arith.constant 1.000000e-01 : f32
    %138 = vector.broadcast %cst_62 : f32 to vector<8x128xf32>
    %139 = arith.mulf %138, %135 : vector<8x128xf32>
    %140 = arith.select %137, %135, %139 : vector<8x128xi1>, vector<8x128xf32>
    %141 = arith.addf %140, %116 : vector<8x128xf32>
    %cst_63 = arith.constant 0.000000e+00 : f32
    %142 = vector.broadcast %cst_63 : f32 to vector<8x128xf32>
    %143 = arith.cmpf ogt, %141, %142 : vector<8x128xf32>
    %cst_64 = arith.constant 1.000000e-01 : f32
    %144 = vector.broadcast %cst_64 : f32 to vector<8x128xf32>
    %145 = arith.mulf %144, %141 : vector<8x128xf32>
    %146 = arith.select %143, %141, %145 : vector<8x128xi1>, vector<8x128xf32>
    %c11 = arith.constant 11 : index
    %c0_65 = arith.constant 0 : index
    %147 = vector.load %arg4[%c11, %c0_65] : memref<18x128xf32, #tpu.memory_space<vmem>>, vector<1x128xf32>
    %c12 = arith.constant 12 : index
    %c0_66 = arith.constant 0 : index
    %148 = vector.load %arg4[%c12, %c0_66] : memref<18x128xf32, #tpu.memory_space<vmem>>, vector<1x128xf32>
    %cst_67 = arith.constant dense<0.000000e+00> : vector<8xf32>
    %149 = vector.multi_reduction <add>, %146, %cst_67 [1] : vector<8x128xf32> to vector<8xf32>
    %150 = vector.shape_cast %149 : vector<8xf32> to vector<8x1xf32>
    %cst_68 = arith.constant 1.280000e+02 : f32
    %151 = vector.broadcast %cst_68 : f32 to vector<8x1xf32>
    %152 = arith.divf %150, %151 : vector<8x1xf32>
    %153 = arith.mulf %146, %146 : vector<8x128xf32>
    %cst_69 = arith.constant dense<0.000000e+00> : vector<8xf32>
    %154 = vector.multi_reduction <add>, %153, %cst_69 [1] : vector<8x128xf32> to vector<8xf32>
    %155 = vector.shape_cast %154 : vector<8xf32> to vector<8x1xf32>
    %cst_70 = arith.constant 1.280000e+02 : f32
    %156 = vector.broadcast %cst_70 : f32 to vector<8x1xf32>
    %157 = arith.divf %155, %156 : vector<8x1xf32>
    %158 = arith.mulf %152, %152 : vector<8x1xf32>
    %159 = arith.subf %157, %158 : vector<8x1xf32>
    %cst_71 = arith.constant 0.000000e+00 : f32
    %160 = vector.broadcast %cst_71 : f32 to vector<8x1xf32>
    %161 = arith.maximumf %159, %160 : vector<8x1xf32>
    %162 = vector.broadcast %152 : vector<8x1xf32> to vector<8x128xf32>
    %163 = arith.subf %146, %162 : vector<8x128xf32>
    %cst_72 = arith.constant 9.99999974E-6 : f32
    %164 = vector.broadcast %cst_72 : f32 to vector<8x1xf32>
    %165 = arith.addf %161, %164 : vector<8x1xf32>
    %166 = math.rsqrt %165 : vector<8x1xf32>
    %167 = vector.broadcast %166 : vector<8x1xf32> to vector<8x128xf32>
    %168 = arith.mulf %163, %167 : vector<8x128xf32>
    %169 = vector.broadcast %147 : vector<1x128xf32> to vector<8x128xf32>
    %170 = arith.mulf %168, %169 : vector<8x128xf32>
    %171 = vector.broadcast %148 : vector<1x128xf32> to vector<8x128xf32>
    %172 = arith.addf %170, %171 : vector<8x128xf32>
    %c5_73 = arith.constant 5 : index
    %c0_74 = arith.constant 0 : index
    %c0_75 = arith.constant 0 : index
    %173 = vector.load %arg3[%c5_73, %c0_74, %c0_75] : memref<8x128x128xbf16, #tpu.memory_space<vmem>>, vector<1x128x128xbf16>
    %174 = vector.shape_cast %173 : vector<1x128x128xbf16> to vector<128x128xbf16>
    %175 = arith.truncf %172 : vector<8x128xf32> to vector<8x128xbf16>
    %cst_76 = arith.constant dense<0.000000e+00> : vector<8x128xf32>
    %176 = tpu.matmul %175, %174, %cst_76 {dimension_numbers = #tpu.dot_dimension_numbers<[1], [0], [0], [1], [0, 0, 1, 1], [], []>} : vector<8x128xbf16>, vector<128x128xbf16>, vector<8x128xf32> -> vector<8x128xf32>
    %c13 = arith.constant 13 : index
    %c0_77 = arith.constant 0 : index
    %177 = vector.load %arg4[%c13, %c0_77] : memref<18x128xf32, #tpu.memory_space<vmem>>, vector<1x128xf32>
    %178 = vector.broadcast %177 : vector<1x128xf32> to vector<8x128xf32>
    %179 = arith.addf %176, %178 : vector<8x128xf32>
    %cst_78 = arith.constant 0.000000e+00 : f32
    %180 = vector.broadcast %cst_78 : f32 to vector<8x128xf32>
    %181 = arith.cmpf ogt, %179, %180 : vector<8x128xf32>
    %cst_79 = arith.constant 1.000000e-01 : f32
    %182 = vector.broadcast %cst_79 : f32 to vector<8x128xf32>
    %183 = arith.mulf %182, %179 : vector<8x128xf32>
    %184 = arith.select %181, %179, %183 : vector<8x128xi1>, vector<8x128xf32>
    %c6_80 = arith.constant 6 : index
    %c0_81 = arith.constant 0 : index
    %c0_82 = arith.constant 0 : index
    %185 = vector.load %arg3[%c6_80, %c0_81, %c0_82] : memref<8x128x128xbf16, #tpu.memory_space<vmem>>, vector<1x128x128xbf16>
    %186 = vector.shape_cast %185 : vector<1x128x128xbf16> to vector<128x128xbf16>
    %187 = arith.truncf %184 : vector<8x128xf32> to vector<8x128xbf16>
    %cst_83 = arith.constant dense<0.000000e+00> : vector<8x128xf32>
    %188 = tpu.matmul %187, %186, %cst_83 {dimension_numbers = #tpu.dot_dimension_numbers<[1], [0], [0], [1], [0, 0, 1, 1], [], []>} : vector<8x128xbf16>, vector<128x128xbf16>, vector<8x128xf32> -> vector<8x128xf32>
    %c14 = arith.constant 14 : index
    %c0_84 = arith.constant 0 : index
    %189 = vector.load %arg4[%c14, %c0_84] : memref<18x128xf32, #tpu.memory_space<vmem>>, vector<1x128xf32>
    %190 = vector.broadcast %189 : vector<1x128xf32> to vector<8x128xf32>
    %191 = arith.addf %188, %190 : vector<8x128xf32>
    %cst_85 = arith.constant 0.000000e+00 : f32
    %192 = vector.broadcast %cst_85 : f32 to vector<8x128xf32>
    %193 = arith.cmpf ogt, %191, %192 : vector<8x128xf32>
    %cst_86 = arith.constant 1.000000e-01 : f32
    %194 = vector.broadcast %cst_86 : f32 to vector<8x128xf32>
    %195 = arith.mulf %194, %191 : vector<8x128xf32>
    %196 = arith.select %193, %191, %195 : vector<8x128xi1>, vector<8x128xf32>
    %197 = arith.addf %196, %172 : vector<8x128xf32>
    %cst_87 = arith.constant 0.000000e+00 : f32
    %198 = vector.broadcast %cst_87 : f32 to vector<8x128xf32>
    %199 = arith.cmpf ogt, %197, %198 : vector<8x128xf32>
    %cst_88 = arith.constant 1.000000e-01 : f32
    %200 = vector.broadcast %cst_88 : f32 to vector<8x128xf32>
    %201 = arith.mulf %200, %197 : vector<8x128xf32>
    %202 = arith.select %199, %197, %201 : vector<8x128xi1>, vector<8x128xf32>
    %c15 = arith.constant 15 : index
    %c0_89 = arith.constant 0 : index
    %203 = vector.load %arg4[%c15, %c0_89] : memref<18x128xf32, #tpu.memory_space<vmem>>, vector<1x128xf32>
    %c16 = arith.constant 16 : index
    %c0_90 = arith.constant 0 : index
    %204 = vector.load %arg4[%c16, %c0_90] : memref<18x128xf32, #tpu.memory_space<vmem>>, vector<1x128xf32>
    %cst_91 = arith.constant dense<0.000000e+00> : vector<8xf32>
    %205 = vector.multi_reduction <add>, %202, %cst_91 [1] : vector<8x128xf32> to vector<8xf32>
    %206 = vector.shape_cast %205 : vector<8xf32> to vector<8x1xf32>
    %cst_92 = arith.constant 1.280000e+02 : f32
    %207 = vector.broadcast %cst_92 : f32 to vector<8x1xf32>
    %208 = arith.divf %206, %207 : vector<8x1xf32>
    %209 = arith.mulf %202, %202 : vector<8x128xf32>
    %cst_93 = arith.constant dense<0.000000e+00> : vector<8xf32>
    %210 = vector.multi_reduction <add>, %209, %cst_93 [1] : vector<8x128xf32> to vector<8xf32>
    %211 = vector.shape_cast %210 : vector<8xf32> to vector<8x1xf32>
    %cst_94 = arith.constant 1.280000e+02 : f32
    %212 = vector.broadcast %cst_94 : f32 to vector<8x1xf32>
    %213 = arith.divf %211, %212 : vector<8x1xf32>
    %214 = arith.mulf %208, %208 : vector<8x1xf32>
    %215 = arith.subf %213, %214 : vector<8x1xf32>
    %cst_95 = arith.constant 0.000000e+00 : f32
    %216 = vector.broadcast %cst_95 : f32 to vector<8x1xf32>
    %217 = arith.maximumf %215, %216 : vector<8x1xf32>
    %218 = vector.broadcast %208 : vector<8x1xf32> to vector<8x128xf32>
    %219 = arith.subf %202, %218 : vector<8x128xf32>
    %cst_96 = arith.constant 9.99999974E-6 : f32
    %220 = vector.broadcast %cst_96 : f32 to vector<8x1xf32>
    %221 = arith.addf %217, %220 : vector<8x1xf32>
    %222 = math.rsqrt %221 : vector<8x1xf32>
    %223 = vector.broadcast %222 : vector<8x1xf32> to vector<8x128xf32>
    %224 = arith.mulf %219, %223 : vector<8x128xf32>
    %225 = vector.broadcast %203 : vector<1x128xf32> to vector<8x128xf32>
    %226 = arith.mulf %224, %225 : vector<8x128xf32>
    %227 = vector.broadcast %204 : vector<1x128xf32> to vector<8x128xf32>
    %228 = arith.addf %226, %227 : vector<8x128xf32>
    %c7_97 = arith.constant 7 : index
    %c0_98 = arith.constant 0 : index
    %c0_99 = arith.constant 0 : index
    %229 = vector.load %arg3[%c7_97, %c0_98, %c0_99] : memref<8x128x128xbf16, #tpu.memory_space<vmem>>, vector<1x128x128xbf16>
    %230 = vector.shape_cast %229 : vector<1x128x128xbf16> to vector<128x128xbf16>
    %231 = arith.truncf %228 : vector<8x128xf32> to vector<8x128xbf16>
    %cst_100 = arith.constant dense<0.000000e+00> : vector<8x128xf32>
    %232 = tpu.matmul %231, %230, %cst_100 {dimension_numbers = #tpu.dot_dimension_numbers<[1], [0], [0], [1], [0, 0, 1, 1], [], []>} : vector<8x128xbf16>, vector<128x128xbf16>, vector<8x128xf32> -> vector<8x128xf32>
    %c17 = arith.constant 17 : index
    %c0_101 = arith.constant 0 : index
    %233 = vector.load %arg4[%c17, %c0_101] : memref<18x128xf32, #tpu.memory_space<vmem>>, vector<1x128xf32>
    %234 = vector.broadcast %233 : vector<1x128xf32> to vector<8x128xf32>
    %235 = arith.addf %232, %234 : vector<8x128xf32>
    %cst_102 = arith.constant dense<0xFF800000> : vector<8xf32>
    %236 = vector.multi_reduction <maximumf>, %235, %cst_102 [1] : vector<8x128xf32> to vector<8xf32>
    %237 = vector.shape_cast %236 : vector<8xf32> to vector<8x1xf32>
    %238 = vector.broadcast %237 : vector<8x1xf32> to vector<8x128xf32>
    %239 = arith.subf %235, %238 : vector<8x128xf32>
    %240 = math.exp %239 : vector<8x128xf32>
    %cst_103 = arith.constant dense<0.000000e+00> : vector<8xf32>
    %241 = vector.multi_reduction <add>, %240, %cst_103 [1] : vector<8x128xf32> to vector<8xf32>
    %242 = vector.shape_cast %241 : vector<8xf32> to vector<8x1xf32>
    %243 = vector.extract_strided_slice %240 {offsets = [0, 0], sizes = [8, 8], strides = [1, 1]} : vector<8x128xf32> to vector<8x8xf32>
    %244 = vector.broadcast %242 : vector<8x1xf32> to vector<8x8xf32>
    %245 = arith.divf %243, %244 : vector<8x8xf32>
    %c0_104 = arith.constant 0 : index
    %c0_105 = arith.constant 0 : index
    %246 = vector.load %arg5[%c0_104, %c0_105] : memref<8x8xf32, #tpu.memory_space<vmem>>, vector<8x8xf32>
    tpu.vector_store %arg5[%c0_104, %c0_105], %245 {strides = array<i32>} : memref<8x8xf32, #tpu.memory_space<vmem>>, vector<8x8xf32>,
    return
  }
  func.func @transform_0(%arg0: i32) -> (i32, i32) {
    %c0_i32 = arith.constant 0 : i32
    %c0_i32_0 = arith.constant 0 : i32
    return %arg0, %c0_i32 : i32, i32
  }
  func.func @transform_1(%arg0: i32) -> (i32, i32) {
    %c0_i32 = arith.constant 0 : i32
    %c0_i32_0 = arith.constant 0 : i32
    %c0_i32_1 = arith.constant 0 : i32
    return %c0_i32, %c0_i32_0 : i32, i32
  }
  func.func @transform_2(%arg0: i32) -> (i32, i32, i32) {
    %c0_i32 = arith.constant 0 : i32
    %c0_i32_0 = arith.constant 0 : i32
    %c0_i32_1 = arith.constant 0 : i32
    %c0_i32_2 = arith.constant 0 : i32
    return %c0_i32, %c0_i32_0, %c0_i32_1 : i32, i32, i32
  }
  func.func @transform_3(%arg0: i32) -> (i32, i32) {
    %c0_i32 = arith.constant 0 : i32
    %c0_i32_0 = arith.constant 0 : i32
    %c0_i32_1 = arith.constant 0 : i32
    return %c0_i32, %c0_i32_0 : i32, i32
  }
  func.func @transform_4(%arg0: i32) -> (i32, i32) {
    %c0_i32 = arith.constant 0 : i32
    %c0_i32_0 = arith.constant 0 : i32
    return %arg0, %c0_i32 : i32, i32
  }
}

</mosaic_0001>

<llo_original>
// kernel: tpu_custom_call.1
$region0: #{tpu_custom_call.1}
  #allocation0 [shape = 'u32[]', space=smem, size = 0x4, offset = 0x4, fixed_abs, tag = 'smem constant byte address 0x4 - core index']
  #allocation1 [shape = 'u32[144,128]{1,0:T(1,128)}', space=vmem, size = 0x12000, scoped, tag = 'internal scratch']
  %s0 = inlined_call_operand.hbm [shape: f32[8,64], index: 0, kind: input, shape index: {}]
  %s1 = inlined_call_operand.hbm [shape: bf16[64,256], index: 1, kind: input, shape index: {}]
  %s2 = inlined_call_operand.hbm [shape: bf16[8,128,128], index: 2, kind: input, shape index: {}]
  %s3 = inlined_call_operand.hbm [shape: f32[18,128], index: 3, kind: input, shape index: {}]
  %s4 = inlined_call_operand.hbm [shape: f32[8,8], index: 4, kind: output, shape index: {}]
  %s5 = sld [smem:[#allocation0]]
  $region42: #{tpu_custom_call.1} parent=0
    _
  %s7 = ssub.s32 1, %s5
  %s8 = scalar_select 0, %s7, %s5
  $region1: #{tpu_custom_call.1} parent=0
    #allocation2 [shape = 'u8[4096]{0}', space=vmem, size = 0x1000, scoped, tag = 'input window, operand 0, single buffered']
    #allocation3 [shape = 's32[1]{0}', space=sflag, size = 0x4, scoped, tag = 'scoped memory for tpu_custom_call.1']
    #allocation4 [shape = 's32[1]{0}', space=sflag, size = 0x4, scoped, tag = 'scoped memory for tpu_custom_call.1']
    #allocation5 [shape = 'u8[32768]{0}', space=vmem, size = 0x8000, scoped, tag = 'input window, operand 1, single buffered']
    #allocation6 [shape = 's32[1]{0}', space=sflag, size = 0x4, scoped, tag = 'scoped memory for tpu_custom_call.1']
    #allocation7 [shape = 'u8[262144]{0}', space=vmem, size = 0x40000, scoped, tag = 'input window, operand 2, single buffered']
    #allocation8 [shape = 'u8[12288]{0}', space=vmem, size = 0x3000, scoped, tag = 'input window, operand 3, single buffered']
    #allocation9 [shape = 's32[1]{0}', space=sflag, size = 0x4, scoped, tag = 'scoped memory for tpu_custom_call.1']
    #allocation10 [shape = 'u8[4096]{0}', space=vmem, size = 0x1000, scoped, tag = 'output window, operand 0, single buffered']
    %9 = vsyncpa [#allocation3], 0
    %10 = vsyncpa [#allocation6], 0
    %11 = vsyncpa [#allocation9], 0
    %12 = vsyncpa [#allocation4], 0
    // Predicated region
    $region2: #{tpu_custom_call.1} parent=1 // pred_check
      _
    $region3: #{tpu_custom_call.1} parent=1 // pred_check_branch
      %14 = sbr.rel (0) target = $region5
    $region4: #{tpu_custom_call.1} parent=1 // pred_region
      %s16 = ssub.s32 128, 128
      %17 = vsyncadd [#allocation3], %s16
      %s19 = sshll.u32 [#allocation2], 4
      %s20 = int_to_ptr.vmem [resolvable:$true] %s19
      %22 = dma.hbm_to_vmem [thread:$0]  %s0, 128, %s20, [#allocation3]
    $region5: #{tpu_custom_call.1} parent=1 // pred_fallthru
      _
    // Predicated region
    $region6: #{tpu_custom_call.1} parent=1 // pred_check
      _
    $region7: #{tpu_custom_call.1} parent=1 // pred_check_branch
      %24 = sbr.rel (0) target = $region9
    $region8: #{tpu_custom_call.1} parent=1 // pred_region
      %s26 = ssub.s32 1024, 1024
      %27 = vsyncadd [#allocation6], %s26
      %s28 = sshll.u32 [#allocation5], 4
      %s29 = int_to_ptr.vmem [resolvable:$true] %s28
      %34 = dma.hbm_to_vmem [thread:$0]  %s1, 1024, %s29, [#allocation6], 128, 128, 8
    $region9: #{tpu_custom_call.1} parent=1 // pred_fallthru
      _
    // Predicated region
    $region10: #{tpu_custom_call.1} parent=1 // pred_check
      _
    $region11: #{tpu_custom_call.1} parent=1 // pred_check_branch
      %36 = sbr.rel (0) target = $region13
    $region12: #{tpu_custom_call.1} parent=1 // pred_region
      %s38 = ssub.s32 8192, 8192
      %39 = vsyncadd [#allocation6], %s38
      %s40 = sshll.u32 [#allocation7], 4
      %s41 = int_to_ptr.vmem [resolvable:$true] %s40
      %46 = dma.hbm_to_vmem [thread:$0]  %s2, 8192, %s41, [#allocation6], 64, 64, 4
    $region13: #{tpu_custom_call.1} parent=1 // pred_fallthru
      _
    // Predicated region
    $region14: #{tpu_custom_call.1} parent=1 // pred_check
      _
    $region15: #{tpu_custom_call.1} parent=1 // pred_check_branch
      %48 = sbr.rel (0) target = $region17
    $region16: #{tpu_custom_call.1} parent=1 // pred_region
      %s50 = ssub.s32 384, 384
      %51 = vsyncadd [#allocation9], %s50
      %s52 = sshll.u32 [#allocation8], 4
      %s53 = int_to_ptr.vmem [resolvable:$true] %s52
      %58 = dma.hbm_to_vmem [thread:$0]  %s3, 384, %s53, [#allocation9], 128, 128, 8
    $region17: #{tpu_custom_call.1} parent=1 // pred_fallthru
      _
    // Predicated region
    $region18: #{tpu_custom_call.1} parent=1 // pred_check
      _
    $region19: #{tpu_custom_call.1} parent=1 // pred_check_branch
      %60 = sbr.rel (0) target = $region21
    $region20: #{tpu_custom_call.1} parent=1 // pred_region
      %61 = dma.done [#allocation3], 128
    $region21: #{tpu_custom_call.1} parent=1 // pred_fallthru
      _
    // Predicated region
    $region22: #{tpu_custom_call.1} parent=1 // pred_check
      _
    $region23: #{tpu_custom_call.1} parent=1 // pred_check_branch
      %63 = sbr.rel (0) target = $region25
    $region24: #{tpu_custom_call.1} parent=1 // pred_region
      %64 = dma.done [#allocation6], 1024
    $region25: #{tpu_custom_call.1} parent=1 // pred_fallthru
      _
    // Predicated region
    $region26: #{tpu_custom_call.1} parent=1 // pred_check
      _
    $region27: #{tpu_custom_call.1} parent=1 // pred_check_branch
      %66 = sbr.rel (0) target = $region29
    $region28: #{tpu_custom_call.1} parent=1 // pred_region
      %67 = dma.done [#allocation6], 8192
    $region29: #{tpu_custom_call.1} parent=1 // pred_fallthru
      _
    // Predicated region
    $region30: #{tpu_custom_call.1} parent=1 // pred_check
      _
    $region31: #{tpu_custom_call.1} parent=1 // pred_check_branch
      %69 = sbr.rel (0) target = $region33
    $region32: #{tpu_custom_call.1} parent=1 // pred_region
      %70 = dma.done [#allocation9], 384
    $region33: #{tpu_custom_call.1} parent=1 // pred_fallthru
      _
    %v72 = vld [vmem:[#allocation2] sm:$0xff]
    %v73 = vpack.c.bf16 %v72, %v72
    %v74 = vld [vmem:[#allocation5] sm:$0xff]
    %v75 = vld [vmem:[#allocation5 + $0x8] sm:$0xff]
    %v76 = vld [vmem:[#allocation5 + $0x10] sm:$0xff]
    %v77 = vld [vmem:[#allocation5 + $0x18] sm:$0xff]
    %v78 = vld [vmem:[#allocation5 + $0x20] sm:$0xff]
    %v79 = vld [vmem:[#allocation5 + $0x28] sm:$0xff]
    %v80 = vld [vmem:[#allocation5 + $0x30] sm:$0xff]
    %v81 = vld [vmem:[#allocation5 + $0x38] sm:$0xff]
    %v90 = vunpack.c.l.b16 %v74
    %v91 = vunpack.c.h.b16 %v74
    %v92 = vunpack.c.l.b16 %v75
    %v93 = vunpack.c.h.b16 %v75
    %v94 = vunpack.c.l.b16 %v76
    %v95 = vunpack.c.h.b16 %v76
    %v96 = vunpack.c.l.b16 %v77
    %v97 = vunpack.c.h.b16 %v77
    %v98 = vunpack.c.l.b16 %v78
    %v99 = vunpack.c.h.b16 %v78
    %v100 = vunpack.c.l.b16 %v79
    %v101 = vunpack.c.h.b16 %v79
    %v102 = vunpack.c.l.b16 %v80
    %v103 = vunpack.c.h.b16 %v80
    %v104 = vunpack.c.l.b16 %v81
    %v105 = vunpack.c.h.b16 %v81
    %v106 = vpack.c.b16 %v92, %v90
    %v107 = vpack.c.b16 %v93, %v91
    %v108 = vpack.c.b16 %v96, %v94
    %v109 = vpack.c.b16 %v97, %v95
    %v110 = vpack.c.b16 %v100, %v98
    %v111 = vpack.c.b16 %v101, %v99
    %v112 = vpack.c.b16 %v104, %v102
    %v113 = vpack.c.b16 %v105, %v103
    %vm122 = vcmask 523264
    %v124 = vsel %vm122, %v73, 0
    %126 = vmatprep.subr.bf16.mxu0 %v107
    %127 = vmatpush1.bf16.msra.mxu0 %v106
    %128 = vmatprep.subr.bf16.mxu0 %v109
    %129 = vmatpush1.bf16.msra.mxu0 %v108
    %130 = vmatprep.subr.bf16.mxu0 %v111
    %131 = vmatpush1.bf16.msra.mxu0 %v110
    %132 = vmatprep.subr.bf16.mxu0 %v113
    %133 = vmatpush1.bf16.msra.mxu0 %v112
    %134 = vmatprep.subr.bf16.mxu0 0
    %135 = vmatpush1.bf16.msra.mxu0 0
    %136 = vmatprep.subr.bf16.mxu0 0
    %137 = vmatpush1.bf16.msra.mxu0 0
    %138 = vmatprep.subr.bf16.mxu0 0
    %139 = vmatpush1.bf16.msra.mxu0 0
    %140 = vmatprep.subr.bf16.mxu0 0
    %141 = vmatpush1.bf16.msra.mxu0 0
    %142 = vmatprep.subr.bf16.mxu0 0
    %143 = vmatpush1.bf16.msra.mxu0 0
    %144 = vmatprep.subr.bf16.mxu0 0
    %145 = vmatpush1.bf16.msra.mxu0 0
    %146 = vmatprep.subr.bf16.mxu0 0
    %147 = vmatpush1.bf16.msra.mxu0 0
    %148 = vmatprep.subr.bf16.mxu0 0
    %149 = vmatpush1.bf16.msra.mxu0 0
    %150 = vmatprep.subr.bf16.mxu0 0
    %151 = vmatpush1.bf16.msra.mxu0 0
    %152 = vmatprep.subr.bf16.mxu0 0
    %153 = vmatpush1.bf16.msra.mxu0 0
    %154 = vmatprep.subr.bf16.mxu0 0
    %155 = vmatpush1.bf16.msra.mxu0 0
    %156 = vmatprep.subr.bf16.mxu0 0
    %157 = vmatpush1.bf16.msra.mxu0 0
    %158 = vmatprep.mubr.bf16.mxu0 0
    %159 = vmatmul.mubr.bf16.gmra.mrb[0].mxu0 %v124
    %v160 = vpop.f32.mrb[0].mxu0
    %v161 = vadd.f32 0.0, %v160
    %v162 = vpop.f32.mrb[0].mxu0
    %v163 = vadd.f32 0.0, %v162
    %v164 = vpop.f32.mrb[0].mxu0
    %v165 = vpop.f32.mrb[0].mxu0
    %166 = vdwg.mxu0
    %v167 = vld [vmem:[#allocation8] sm:$0x1]
    %v168 = vlaneseq
    %v169 = vshrl.u32 %v168, 7
    %v170 = vsub.s32 0, %v169
    %v171 = vrot.slane %v167, %v170
    %v172 = vadd.f32 %v161, %v171
    %vm173 = vcmp.gt.f32.partialorder %v172, 0.0
    %v174 = vmul.f32 %v172, 0.1
    %v175 = vsel %vm173, %v172, %v174
    %v176 = vld [vmem:[#allocation8 + $0x1] sm:$0x1]
    %v177 = vlaneseq
    %v178 = vshrl.u32 %v177, 7
    %v179 = vsub.s32 0, %v178
    %v180 = vrot.slane %v176, %v179
    %v181 = vadd.f32 %v163, %v180
    %v182 = vld [vmem:[#allocation7] sm:$0xf]
    %v183 = vld [vmem:[#allocation7 + $0x4] sm:$0xf]
    %v184 = vld [vmem:[#allocation7 + $0x8] sm:$0xf]
    %v185 = vld [vmem:[#allocation7 + $0xc] sm:$0xf]
    %v186 = vld [vmem:[#allocation7 + $0x10] sm:$0xf]
    %v187 = vld [vmem:[#allocation7 + $0x14] sm:$0xf]
    %v188 = vld [vmem:[#allocation7 + $0x18] sm:$0xf]
    %v189 = vld [vmem:[#allocation7 + $0x1c] sm:$0xf]
    %v190 = vld [vmem:[#allocation7 + $0x20] sm:$0xf]
    %v191 = vld [vmem:[#allocation7 + $0x24] sm:$0xf]
    %v192 = vld [vmem:[#allocation7 + $0x28] sm:$0xf]
    %v193 = vld [vmem:[#allocation7 + $0x2c] sm:$0xf]
    %v194 = vld [vmem:[#allocation7 + $0x30] sm:$0xf]
    %v195 = vld [vmem:[#allocation7 + $0x34] sm:$0xf]
    %v196 = vld [vmem:[#allocation7 + $0x38] sm:$0xf]
    %v197 = vld [vmem:[#allocation7 + $0x3c] sm:$0xf]
    %v198 = vpack.c.bf16 %v175, %v175
    %v199 = vld [vmem:[#allocation8 + $0x2] sm:$0x1]
    %v200 = vlaneseq
    %v201 = vshrl.u32 %v200, 7
    %v202 = vsub.s32 0, %v201
    %v203 = vrot.slane %v199, %v202
    %v220 = vunpack.c.l.b16 %v182
    %v221 = vunpack.c.l.b16 %v183
    %v222 = vunpack.c.l.b16 %v184
    %v223 = vunpack.c.l.b16 %v185
    %v224 = vunpack.c.l.b16 %v186
    %v225 = vunpack.c.l.b16 %v187
    %v226 = vunpack.c.l.b16 %v188
    %v227 = vunpack.c.l.b16 %v189
    %v228 = vunpack.c.l.b16 %v190
    %v229 = vunpack.c.l.b16 %v191
    %v230 = vunpack.c.l.b16 %v192
    %v231 = vunpack.c.l.b16 %v193
    %v232 = vunpack.c.l.b16 %v194
    %v233 = vunpack.c.l.b16 %v195
    %v234 = vunpack.c.l.b16 %v196
    %v235 = vunpack.c.l.b16 %v197
    %v236 = vpack.c.b16 %v221, %v220
    %v237 = vpack.c.b16 %v223, %v222
    %v238 = vpack.c.b16 %v225, %v224
    %v239 = vpack.c.b16 %v227, %v226
    %v240 = vpack.c.b16 %v229, %v228
    %v241 = vpack.c.b16 %v231, %v230
    %v242 = vpack.c.b16 %v233, %v232
    %v243 = vpack.c.b16 %v235, %v234
    %252 = vmatprep.subr.bf16.mxu0 0
    %253 = vmatpush1.bf16.msra.mxu0 %v236
    %254 = vmatprep.subr.bf16.mxu0 0
    %255 = vmatpush1.bf16.msra.mxu0 %v237
    %256 = vmatprep.subr.bf16.mxu0 0
    %257 = vmatpush1.bf16.msra.mxu0 %v238
    %258 = vmatprep.subr.bf16.mxu0 0
    %259 = vmatpush1.bf16.msra.mxu0 %v239
    %260 = vmatprep.subr.bf16.mxu0 0
    %261 = vmatpush1.bf16.msra.mxu0 %v240
    %262 = vmatprep.subr.bf16.mxu0 0
    %263 = vmatpush1.bf16.msra.mxu0 %v241
    %264 = vmatprep.subr.bf16.mxu0 0
    %265 = vmatpush1.bf16.msra.mxu0 %v242
    %266 = vmatprep.subr.bf16.mxu0 0
    %267 = vmatpush1.bf16.msra.mxu0 %v243
    %268 = vmatprep.subr.bf16.mxu0 0
    %269 = vmatpush1.bf16.msra.mxu0 0
    %270 = vmatprep.subr.bf16.mxu0 0
    %271 = vmatpush1.bf16.msra.mxu0 0
    %272 = vmatprep.subr.bf16.mxu0 0
    %273 = vmatpush1.bf16.msra.mxu0 0
    %274 = vmatprep.subr.bf16.mxu0 0
    %275 = vmatpush1.bf16.msra.mxu0 0
    %276 = vmatprep.subr.bf16.mxu0 0
    %277 = vmatpush1.bf16.msra.mxu0 0
    %278 = vmatprep.subr.bf16.mxu0 0
    %279 = vmatpush1.bf16.msra.mxu0 0
    %280 = vmatprep.subr.bf16.mxu0 0
    %281 = vmatpush1.bf16.msra.mxu0 0
    %282 = vmatprep.subr.bf16.mxu0 0
    %283 = vmatpush1.bf16.msra.mxu0 0
    %284 = vmatprep.mubr.bf16.mxu0 0
    %285 = vmatmul.mubr.bf16.gmra.mrb[0].mxu0 %v198
    %v286 = vpop.f32.mrb[0].mxu0
    %v287 = vadd.f32 %v203, %v286
    %v288 = vpop.f32.mrb[0].mxu0
    %v289 = vpop.f32.mrb[0].mxu0
    %v290 = vpop.f32.mrb[0].mxu0
    %291 = vdwg.mxu0
    %vm292 = vcmp.gt.f32.partialorder %v287, 0.0
    %v293 = vmul.f32 %v287, 0.1
    %v294 = vsel %vm292, %v287, %v293
    %v295 = vadd.f32 %v294, %v181
    %vm296 = vcmp.gt.f32.partialorder %v295, 0.0
    %v297 = vmul.f32 %v295, 0.1
    %v298 = vsel %vm296, %v295, %v297
    %v299 = vld [vmem:[#allocation8 + $0x3] sm:$0x1]
    %v300 = vld [vmem:[#allocation8 + $0x4] sm:$0x1]
    %301 = vadd.xlane.f32.xlu0 %v298
    %v302 = vpop.xlane.xlu0 %301
    %v303 = vrcp.pop 128.0
    %v304 = vmul.f32 %v302, %v303
    %v305 = vmul.f32 %v298, %v298
    %306 = vadd.xlane.f32.xlu0 %v305
    %v307 = vpop.xlane.xlu0 %306
    %v308 = vmul.f32 %v307, %v303
    %v309 = vmul.f32 %v304, %v304
    %v310 = vsub.f32 %v308, %v309
    %v311 = vmax.f32 %v310, 0.0
    %v312 = vsub.f32 %v298, %v304
    %v313 = vadd.f32 %v311, 1e-05
    %v314 = vrsqrt.pop %v313
    %v315 = vmul.f32 %v312, %v314
    %v316 = vlaneseq
    %v317 = vshrl.u32 %v316, 7
    %v318 = vsub.s32 0, %v317
    %v319 = vrot.slane %v299, %v318
    %v320 = vmul.f32 %v315, %v319
    %v321 = vlaneseq
    %v322 = vshrl.u32 %v321, 7
    %v323 = vsub.s32 0, %v322
    %v324 = vrot.slane %v300, %v323
    %v325 = vadd.f32 %v320, %v324
    %s326 = scalar_lea.vmem [#allocation7], 64
    %v327 = vld [vmem:[%s326] sm:$0xf]
    %v328 = vld [vmem:[%s326 + $0x4] sm:$0xf]
    %v329 = vld [vmem:[%s326 + $0x8] sm:$0xf]
    %v330 = vld [vmem:[%s326 + $0xc] sm:$0xf]
    %v331 = vld [vmem:[%s326 + $0x10] sm:$0xf]
    %v332 = vld [vmem:[%s326 + $0x14] sm:$0xf]
    %v333 = vld [vmem:[%s326 + $0x18] sm:$0xf]
    %v334 = vld [vmem:[%s326 + $0x1c] sm:$0xf]
    %v335 = vld [vmem:[%s326 + $0x20] sm:$0xf]
    %v336 = vld [vmem:[%s326 + $0x24] sm:$0xf]
    %v337 = vld [vmem:[%s326 + $0x28] sm:$0xf]
    %v338 = vld [vmem:[%s326 + $0x2c] sm:$0xf]
    %v339 = vld [vmem:[%s326 + $0x30] sm:$0xf]
    %v340 = vld [vmem:[%s326 + $0x34] sm:$0xf]
    %v341 = vld [vmem:[%s326 + $0x38] sm:$0xf]
    %v342 = vld [vmem:[%s326 + $0x3c] sm:$0xf]
    %v343 = vpack.c.bf16 %v325, %v325
    %v344 = vld [vmem:[#allocation8 + $0x5] sm:$0x1]
    %v345 = vlaneseq
    %v346 = vshrl.u32 %v345, 7
    %v347 = vsub.s32 0, %v346
    %v348 = vrot.slane %v344, %v347
    %v365 = vunpack.c.l.b16 %v327
    %v366 = vunpack.c.l.b16 %v328
    %v367 = vunpack.c.l.b16 %v329
    %v368 = vunpack.c.l.b16 %v330
    %v369 = vunpack.c.l.b16 %v331
    %v370 = vunpack.c.l.b16 %v332
    %v371 = vunpack.c.l.b16 %v333
    %v372 = vunpack.c.l.b16 %v334
    %v373 = vunpack.c.l.b16 %v335
    %v374 = vunpack.c.l.b16 %v336
    %v375 = vunpack.c.l.b16 %v337
    %v376 = vunpack.c.l.b16 %v338
    %v377 = vunpack.c.l.b16 %v339
    %v378 = vunpack.c.l.b16 %v340
    %v379 = vunpack.c.l.b16 %v341
    %v380 = vunpack.c.l.b16 %v342
    %v381 = vpack.c.b16 %v366, %v365
    %v382 = vpack.c.b16 %v368, %v367
    %v383 = vpack.c.b16 %v370, %v369
    %v384 = vpack.c.b16 %v372, %v371
    %v385 = vpack.c.b16 %v374, %v373
    %v386 = vpack.c.b16 %v376, %v375
    %v387 = vpack.c.b16 %v378, %v377
    %v388 = vpack.c.b16 %v380, %v379
    %397 = vmatprep.subr.bf16.mxu0 0
    %398 = vmatpush1.bf16.msra.mxu0 %v381
    %399 = vmatprep.subr.bf16.mxu0 0
    %400 = vmatpush1.bf16.msra.mxu0 %v382
    %401 = vmatprep.subr.bf16.mxu0 0
    %402 = vmatpush1.bf16.msra.mxu0 %v383
    %403 = vmatprep.subr.bf16.mxu0 0
    %404 = vmatpush1.bf16.msra.mxu0 %v384
    %405 = vmatprep.subr.bf16.mxu0 0
    %406 = vmatpush1.bf16.msra.mxu0 %v385
    %407 = vmatprep.subr.bf16.mxu0 0
    %408 = vmatpush1.bf16.msra.mxu0 %v386
    %409 = vmatprep.subr.bf16.mxu0 0
    %410 = vmatpush1.bf16.msra.mxu0 %v387
    %411 = vmatprep.subr.bf16.mxu0 0
    %412 = vmatpush1.bf16.msra.mxu0 %v388
    %413 = vmatprep.subr.bf16.mxu0 0
    %414 = vmatpush1.bf16.msra.mxu0 0
    %415 = vmatprep.subr.bf16.mxu0 0
    %416 = vmatpush1.bf16.msra.mxu0 0
    %417 = vmatprep.subr.bf16.mxu0 0
    %418 = vmatpush1.bf16.msra.mxu0 0
    %419 = vmatprep.subr.bf16.mxu0 0
    %420 = vmatpush1.bf16.msra.mxu0 0
    %421 = vmatprep.subr.bf16.mxu0 0
    %422 = vmatpush1.bf16.msra.mxu0 0
    %423 = vmatprep.subr.bf16.mxu0 0
    %424 = vmatpush1.bf16.msra.mxu0 0
    %425 = vmatprep.subr.bf16.mxu0 0
    %426 = vmatpush1.bf16.msra.mxu0 0
    %427 = vmatprep.subr.bf16.mxu0 0
    %428 = vmatpush1.bf16.msra.mxu0 0
    %429 = vmatprep.mubr.bf16.mxu0 0
    %430 = vmatmul.mubr.bf16.gmra.mrb[0].mxu0 %v343
    %v431 = vpop.f32.mrb[0].mxu0
    %v432 = vadd.f32 %v348, %v431
    %v433 = vpop.f32.mrb[0].mxu0
    %v434 = vpop.f32.mrb[0].mxu0
    %v435 = vpop.f32.mrb[0].mxu0
    %436 = vdwg.mxu0
    %vm437 = vcmp.gt.f32.partialorder %v432, 0.0
    %v438 = vmul.f32 %v432, 0.1
    %v439 = vsel %vm437, %v432, %v438
    %s440 = scalar_lea.vmem [#allocation7], 128
    %v441 = vld [vmem:[%s440] sm:$0xf]
    %v442 = vld [vmem:[%s440 + $0x4] sm:$0xf]
    %v443 = vld [vmem:[%s440 + $0x8] sm:$0xf]
    %v444 = vld [vmem:[%s440 + $0xc] sm:$0xf]
    %v445 = vld [vmem:[%s440 + $0x10] sm:$0xf]
    %v446 = vld [vmem:[%s440 + $0x14] sm:$0xf]
    %v447 = vld [vmem:[%s440 + $0x18] sm:$0xf]
    %v448 = vld [vmem:[%s440 + $0x1c] sm:$0xf]
    %v449 = vld [vmem:[%s440 + $0x20] sm:$0xf]
    %v450 = vld [vmem:[%s440 + $0x24] sm:$0xf]
    %v451 = vld [vmem:[%s440 + $0x28] sm:$0xf]
    %v452 = vld [vmem:[%s440 + $0x2c] sm:$0xf]
    %v453 = vld [vmem:[%s440 + $0x30] sm:$0xf]
    %v454 = vld [vmem:[%s440 + $0x34] sm:$0xf]
    %v455 = vld [vmem:[%s440 + $0x38] sm:$0xf]
    %v456 = vld [vmem:[%s440 + $0x3c] sm:$0xf]
    %v457 = vpack.c.bf16 %v439, %v439
    %v458 = vld [vmem:[#allocation8 + $0x6] sm:$0x1]
    %v459 = vlaneseq
    %v460 = vshrl.u32 %v459, 7
    %v461 = vsub.s32 0, %v460
    %v462 = vrot.slane %v458, %v461
    %v479 = vunpack.c.l.b16 %v441
    %v480 = vunpack.c.l.b16 %v442
    %v481 = vunpack.c.l.b16 %v443
    %v482 = vunpack.c.l.b16 %v444
    %v483 = vunpack.c.l.b16 %v445
    %v484 = vunpack.c.l.b16 %v446
    %v485 = vunpack.c.l.b16 %v447
    %v486 = vunpack.c.l.b16 %v448
    %v487 = vunpack.c.l.b16 %v449
    %v488 = vunpack.c.l.b16 %v450
    %v489 = vunpack.c.l.b16 %v451
    %v490 = vunpack.c.l.b16 %v452
    %v491 = vunpack.c.l.b16 %v453
    %v492 = vunpack.c.l.b16 %v454
    %v493 = vunpack.c.l.b16 %v455
    %v494 = vunpack.c.l.b16 %v456
    %v495 = vpack.c.b16 %v480, %v479
    %v496 = vpack.c.b16 %v482, %v481
    %v497 = vpack.c.b16 %v484, %v483
    %v498 = vpack.c.b16 %v486, %v485
    %v499 = vpack.c.b16 %v488, %v487
    %v500 = vpack.c.b16 %v490, %v489
    %v501 = vpack.c.b16 %v492, %v491
    %v502 = vpack.c.b16 %v494, %v493
    %511 = vmatprep.subr.bf16.mxu0 0
    %512 = vmatpush1.bf16.msra.mxu0 %v495
    %513 = vmatprep.subr.bf16.mxu0 0
    %514 = vmatpush1.bf16.msra.mxu0 %v496
    %515 = vmatprep.subr.bf16.mxu0 0
    %516 = vmatpush1.bf16.msra.mxu0 %v497
    %517 = vmatprep.subr.bf16.mxu0 0
    %518 = vmatpush1.bf16.msra.mxu0 %v498
    %519 = vmatprep.subr.bf16.mxu0 0
    %520 = vmatpush1.bf16.msra.mxu0 %v499
    %521 = vmatprep.subr.bf16.mxu0 0
    %522 = vmatpush1.bf16.msra.mxu0 %v500
    %523 = vmatprep.subr.bf16.mxu0 0
    %524 = vmatpush1.bf16.msra.mxu0 %v501
    %525 = vmatprep.subr.bf16.mxu0 0
    %526 = vmatpush1.bf16.msra.mxu0 %v502
    %527 = vmatprep.subr.bf16.mxu0 0
    %528 = vmatpush1.bf16.msra.mxu0 0
    %529 = vmatprep.subr.bf16.mxu0 0
    %530 = vmatpush1.bf16.msra.mxu0 0
    %531 = vmatprep.subr.bf16.mxu0 0
    %532 = vmatpush1.bf16.msra.mxu0 0
    %533 = vmatprep.subr.bf16.mxu0 0
    %534 = vmatpush1.bf16.msra.mxu0 0
    %535 = vmatprep.subr.bf16.mxu0 0
    %536 = vmatpush1.bf16.msra.mxu0 0
    %537 = vmatprep.subr.bf16.mxu0 0
    %538 = vmatpush1.bf16.msra.mxu0 0
    %539 = vmatprep.subr.bf16.mxu0 0
    %540 = vmatpush1.bf16.msra.mxu0 0
    %541 = vmatprep.subr.bf16.mxu0 0
    %542 = vmatpush1.bf16.msra.mxu0 0
    %543 = vmatprep.mubr.bf16.mxu0 0
    %544 = vmatmul.mubr.bf16.gmra.mrb[0].mxu0 %v457
    %v545 = vpop.f32.mrb[0].mxu0
    %v546 = vadd.f32 %v462, %v545
    %v547 = vpop.f32.mrb[0].mxu0
    %v548 = vpop.f32.mrb[0].mxu0
    %v549 = vpop.f32.mrb[0].mxu0
    %550 = vdwg.mxu0
    %vm551 = vcmp.gt.f32.partialorder %v546, 0.0
    %v552 = vmul.f32 %v546, 0.1
    %v553 = vsel %vm551, %v546, %v552
    %v554 = vadd.f32 %v553, %v325
    %vm555 = vcmp.gt.f32.partialorder %v554, 0.0
    %v556 = vmul.f32 %v554, 0.1
    %v557 = vsel %vm555, %v554, %v556
    %v558 = vld [vmem:[#allocation8 + $0x7] sm:$0x1]
    %v559 = vld [vmem:[#allocation8 + $0x8] sm:$0x1]
    %560 = vadd.xlane.f32.xlu0 %v557
    %v561 = vpop.xlane.xlu0 %560
    %v562 = vmul.f32 %v561, %v303
    %v563 = vmul.f32 %v557, %v557
    %564 = vadd.xlane.f32.xlu0 %v563
    %v565 = vpop.xlane.xlu0 %564
    %v566 = vmul.f32 %v565, %v303
    %v567 = vmul.f32 %v562, %v562
    %v568 = vsub.f32 %v566, %v567
    %v569 = vmax.f32 %v568, 0.0
    %v570 = vsub.f32 %v557, %v562
    %v571 = vadd.f32 %v569, 1e-05
    %v572 = vrsqrt.pop %v571
    %v573 = vmul.f32 %v570, %v572
    %v574 = vlaneseq
    %v575 = vshrl.u32 %v574, 7
    %v576 = vsub.s32 0, %v575
    %v577 = vrot.slane %v558, %v576
    %v578 = vmul.f32 %v573, %v577
    %v579 = vlaneseq
    %v580 = vshrl.u32 %v579, 7
    %v581 = vsub.s32 0, %v580
    %v582 = vrot.slane %v559, %v581
    %v583 = vadd.f32 %v578, %v582
    %s584 = scalar_lea.vmem [#allocation7], 192
    %v585 = vld [vmem:[%s584] sm:$0xf]
    %v586 = vld [vmem:[%s584 + $0x4] sm:$0xf]
    %v587 = vld [vmem:[%s584 + $0x8] sm:$0xf]
    %v588 = vld [vmem:[%s584 + $0xc] sm:$0xf]
    %v589 = vld [vmem:[%s584 + $0x10] sm:$0xf]
    %v590 = vld [vmem:[%s584 + $0x14] sm:$0xf]
    %v591 = vld [vmem:[%s584 + $0x18] sm:$0xf]
    %v592 = vld [vmem:[%s584 + $0x1c] sm:$0xf]
    %v593 = vld [vmem:[%s584 + $0x20] sm:$0xf]
    %v594 = vld [vmem:[%s584 + $0x24] sm:$0xf]
    %v595 = vld [vmem:[%s584 + $0x28] sm:$0xf]
    %v596 = vld [vmem:[%s584 + $0x2c] sm:$0xf]
    %v597 = vld [vmem:[%s584 + $0x30] sm:$0xf]
    %v598 = vld [vmem:[%s584 + $0x34] sm:$0xf]
    %v599 = vld [vmem:[%s584 + $0x38] sm:$0xf]
    %v600 = vld [vmem:[%s584 + $0x3c] sm:$0xf]
    %v601 = vpack.c.bf16 %v583, %v583
    %v602 = vld [vmem:[#allocation8 + $0x9] sm:$0x1]
    %v603 = vlaneseq
    %v604 = vshrl.u32 %v603, 7
    %v605 = vsub.s32 0, %v604
    %v606 = vrot.slane %v602, %v605
    %v623 = vunpack.c.l.b16 %v585
    %v624 = vunpack.c.l.b16 %v586
    %v625 = vunpack.c.l.b16 %v587
    %v626 = vunpack.c.l.b16 %v588
    %v627 = vunpack.c.l.b16 %v589
    %v628 = vunpack.c.l.b16 %v590
    %v629 = vunpack.c.l.b16 %v591
    %v630 = vunpack.c.l.b16 %v592
    %v631 = vunpack.c.l.b16 %v593
    %v632 = vunpack.c.l.b16 %v594
    %v633 = vunpack.c.l.b16 %v595
    %v634 = vunpack.c.l.b16 %v596
    %v635 = vunpack.c.l.b16 %v597
    %v636 = vunpack.c.l.b16 %v598
    %v637 = vunpack.c.l.b16 %v599
    %v638 = vunpack.c.l.b16 %v600
    %v639 = vpack.c.b16 %v624, %v623
    %v640 = vpack.c.b16 %v626, %v625
    %v641 = vpack.c.b16 %v628, %v627
    %v642 = vpack.c.b16 %v630, %v629
    %v643 = vpack.c.b16 %v632, %v631
    %v644 = vpack.c.b16 %v634, %v633
    %v645 = vpack.c.b16 %v636, %v635
    %v646 = vpack.c.b16 %v638, %v637
    %655 = vmatprep.subr.bf16.mxu0 0
    %656 = vmatpush1.bf16.msra.mxu0 %v639
    %657 = vmatprep.subr.bf16.mxu0 0
    %658 = vmatpush1.bf16.msra.mxu0 %v640
    %659 = vmatprep.subr.bf16.mxu0 0
    %660 = vmatpush1.bf16.msra.mxu0 %v641
    %661 = vmatprep.subr.bf16.mxu0 0
    %662 = vmatpush1.bf16.msra.mxu0 %v642
    %663 = vmatprep.subr.bf16.mxu0 0
    %664 = vmatpush1.bf16.msra.mxu0 %v643
    %665 = vmatprep.subr.bf16.mxu0 0
    %666 = vmatpush1.bf16.msra.mxu0 %v644
    %667 = vmatprep.subr.bf16.mxu0 0
    %668 = vmatpush1.bf16.msra.mxu0 %v645
    %669 = vmatprep.subr.bf16.mxu0 0
    %670 = vmatpush1.bf16.msra.mxu0 %v646
    %671 = vmatprep.subr.bf16.mxu0 0
    %672 = vmatpush1.bf16.msra.mxu0 0
    %673 = vmatprep.subr.bf16.mxu0 0
    %674 = vmatpush1.bf16.msra.mxu0 0
    %675 = vmatprep.subr.bf16.mxu0 0
    %676 = vmatpush1.bf16.msra.mxu0 0
    %677 = vmatprep.subr.bf16.mxu0 0
    %678 = vmatpush1.bf16.msra.mxu0 0
    %679 = vmatprep.subr.bf16.mxu0 0
    %680 = vmatpush1.bf16.msra.mxu0 0
    %681 = vmatprep.subr.bf16.mxu0 0
    %682 = vmatpush1.bf16.msra.mxu0 0
    %683 = vmatprep.subr.bf16.mxu0 0
    %684 = vmatpush1.bf16.msra.mxu0 0
    %685 = vmatprep.subr.bf16.mxu0 0
    %686 = vmatpush1.bf16.msra.mxu0 0
    %687 = vmatprep.mubr.bf16.mxu0 0
    %688 = vmatmul.mubr.bf16.gmra.mrb[0].mxu0 %v601
    %v689 = vpop.f32.mrb[0].mxu0
    %v690 = vadd.f32 %v606, %v689
    %v691 = vpop.f32.mrb[0].mxu0
    %v692 = vpop.f32.mrb[0].mxu0
    %v693 = vpop.f32.mrb[0].mxu0
    %694 = vdwg.mxu0
    %vm695 = vcmp.gt.f32.partialorder %v690, 0.0
    %v696 = vmul.f32 %v690, 0.1
    %v697 = vsel %vm695, %v690, %v696
    %s698 = scalar_lea.vmem [#allocation7], 256
    %v699 = vld [vmem:[%s698] sm:$0xf]
    %v700 = vld [vmem:[%s698 + $0x4] sm:$0xf]
    %v701 = vld [vmem:[%s698 + $0x8] sm:$0xf]
    %v702 = vld [vmem:[%s698 + $0xc] sm:$0xf]
    %v703 = vld [vmem:[%s698 + $0x10] sm:$0xf]
    %v704 = vld [vmem:[%s698 + $0x14] sm:$0xf]
    %v705 = vld [vmem:[%s698 + $0x18] sm:$0xf]
    %v706 = vld [vmem:[%s698 + $0x1c] sm:$0xf]
    %v707 = vld [vmem:[%s698 + $0x20] sm:$0xf]
    %v708 = vld [vmem:[%s698 + $0x24] sm:$0xf]
    %v709 = vld [vmem:[%s698 + $0x28] sm:$0xf]
    %v710 = vld [vmem:[%s698 + $0x2c] sm:$0xf]
    %v711 = vld [vmem:[%s698 + $0x30] sm:$0xf]
    %v712 = vld [vmem:[%s698 + $0x34] sm:$0xf]
    %v713 = vld [vmem:[%s698 + $0x38] sm:$0xf]
    %v714 = vld [vmem:[%s698 + $0x3c] sm:$0xf]
    %v715 = vpack.c.bf16 %v697, %v697
    %v716 = vld [vmem:[#allocation8 + $0xa] sm:$0x1]
    %v717 = vlaneseq
    %v718 = vshrl.u32 %v717, 7
    %v719 = vsub.s32 0, %v718
    %v720 = vrot.slane %v716, %v719
    %v737 = vunpack.c.l.b16 %v699
    %v738 = vunpack.c.l.b16 %v700
    %v739 = vunpack.c.l.b16 %v701
    %v740 = vunpack.c.l.b16 %v702
    %v741 = vunpack.c.l.b16 %v703
    %v742 = vunpack.c.l.b16 %v704
    %v743 = vunpack.c.l.b16 %v705
    %v744 = vunpack.c.l.b16 %v706
    %v745 = vunpack.c.l.b16 %v707
    %v746 = vunpack.c.l.b16 %v708
    %v747 = vunpack.c.l.b16 %v709
    %v748 = vunpack.c.l.b16 %v710
    %v749 = vunpack.c.l.b16 %v711
    %v750 = vunpack.c.l.b16 %v712
    %v751 = vunpack.c.l.b16 %v713
    %v752 = vunpack.c.l.b16 %v714
    %v753 = vpack.c.b16 %v738, %v737
    %v754 = vpack.c.b16 %v740, %v739
    %v755 = vpack.c.b16 %v742, %v741
    %v756 = vpack.c.b16 %v744, %v743
    %v757 = vpack.c.b16 %v746, %v745
    %v758 = vpack.c.b16 %v748, %v747
    %v759 = vpack.c.b16 %v750, %v749
    %v760 = vpack.c.b16 %v752, %v751
    %769 = vmatprep.subr.bf16.mxu0 0
    %770 = vmatpush1.bf16.msra.mxu0 %v753
    %771 = vmatprep.subr.bf16.mxu0 0
    %772 = vmatpush1.bf16.msra.mxu0 %v754
    %773 = vmatprep.subr.bf16.mxu0 0
    %774 = vmatpush1.bf16.msra.mxu0 %v755
    %775 = vmatprep.subr.bf16.mxu0 0
    %776 = vmatpush1.bf16.msra.mxu0 %v756
    %777 = vmatprep.subr.bf16.mxu0 0
    %778 = vmatpush1.bf16.msra.mxu0 %v757
    %779 = vmatprep.subr.bf16.mxu0 0
    %780 = vmatpush1.bf16.msra.mxu0 %v758
    %781 = vmatprep.subr.bf16.mxu0 0
    %782 = vmatpush1.bf16.msra.mxu0 %v759
    %783 = vmatprep.subr.bf16.mxu0 0
    %784 = vmatpush1.bf16.msra.mxu0 %v760
    %785 = vmatprep.subr.bf16.mxu0 0
    %786 = vmatpush1.bf16.msra.mxu0 0
    %787 = vmatprep.subr.bf16.mxu0 0
    %788 = vmatpush1.bf16.msra.mxu0 0
    %789 = vmatprep.subr.bf16.mxu0 0
    %790 = vmatpush1.bf16.msra.mxu0 0
    %791 = vmatprep.subr.bf16.mxu0 0
    %792 = vmatpush1.bf16.msra.mxu0 0
    %793 = vmatprep.subr.bf16.mxu0 0
    %794 = vmatpush1.bf16.msra.mxu0 0
    %795 = vmatprep.subr.bf16.mxu0 0
    %796 = vmatpush1.bf16.msra.mxu0 0
    %797 = vmatprep.subr.bf16.mxu0 0
    %798 = vmatpush1.bf16.msra.mxu0 0
    %799 = vmatprep.subr.bf16.mxu0 0
    %800 = vmatpush1.bf16.msra.mxu0 0
    %801 = vmatprep.mubr.bf16.mxu0 0
    %802 = vmatmul.mubr.bf16.gmra.mrb[0].mxu0 %v715
    %v803 = vpop.f32.mrb[0].mxu0
    %v804 = vadd.f32 %v720, %v803
    %v805 = vpop.f32.mrb[0].mxu0
    %v806 = vpop.f32.mrb[0].mxu0
    %v807 = vpop.f32.mrb[0].mxu0
    %808 = vdwg.mxu0
    %vm809 = vcmp.gt.f32.partialorder %v804, 0.0
    %v810 = vmul.f32 %v804, 0.1
    %v811 = vsel %vm809, %v804, %v810
    %v812 = vadd.f32 %v811, %v583
    %vm813 = vcmp.gt.f32.partialorder %v812, 0.0
    %v814 = vmul.f32 %v812, 0.1
    %v815 = vsel %vm813, %v812, %v814
    %v816 = vld [vmem:[#allocation8 + $0xb] sm:$0x1]
    %v817 = vld [vmem:[#allocation8 + $0xc] sm:$0x1]
    %818 = vadd.xlane.f32.xlu0 %v815
    %v819 = vpop.xlane.xlu0 %818
    %v820 = vmul.f32 %v819, %v303
    %v821 = vmul.f32 %v815, %v815
    %822 = vadd.xlane.f32.xlu0 %v821
    %v823 = vpop.xlane.xlu0 %822
    %v824 = vmul.f32 %v823, %v303
    %v825 = vmul.f32 %v820, %v820
    %v826 = vsub.f32 %v824, %v825
    %v827 = vmax.f32 %v826, 0.0
    %v828 = vsub.f32 %v815, %v820
    %v829 = vadd.f32 %v827, 1e-05
    %v830 = vrsqrt.pop %v829
    %v831 = vmul.f32 %v828, %v830
    %v832 = vlaneseq
    %v833 = vshrl.u32 %v832, 7
    %v834 = vsub.s32 0, %v833
    %v835 = vrot.slane %v816, %v834
    %v836 = vmul.f32 %v831, %v835
    %v837 = vlaneseq
    %v838 = vshrl.u32 %v837, 7
    %v839 = vsub.s32 0, %v838
    %v840 = vrot.slane %v817, %v839
    %v841 = vadd.f32 %v836, %v840
    %s842 = scalar_lea.vmem [#allocation7], 320
    %v843 = vld [vmem:[%s842] sm:$0xf]
    %v844 = vld [vmem:[%s842 + $0x4] sm:$0xf]
    %v845 = vld [vmem:[%s842 + $0x8] sm:$0xf]
    %v846 = vld [vmem:[%s842 + $0xc] sm:$0xf]
    %v847 = vld [vmem:[%s842 + $0x10] sm:$0xf]
    %v848 = vld [vmem:[%s842 + $0x14] sm:$0xf]
    %v849 = vld [vmem:[%s842 + $0x18] sm:$0xf]
    %v850 = vld [vmem:[%s842 + $0x1c] sm:$0xf]
    %v851 = vld [vmem:[%s842 + $0x20] sm:$0xf]
    %v852 = vld [vmem:[%s842 + $0x24] sm:$0xf]
    %v853 = vld [vmem:[%s842 + $0x28] sm:$0xf]
    %v854 = vld [vmem:[%s842 + $0x2c] sm:$0xf]
    %v855 = vld [vmem:[%s842 + $0x30] sm:$0xf]
    %v856 = vld [vmem:[%s842 + $0x34] sm:$0xf]
    %v857 = vld [vmem:[%s842 + $0x38] sm:$0xf]
    %v858 = vld [vmem:[%s842 + $0x3c] sm:$0xf]
    %v859 = vpack.c.bf16 %v841, %v841
    %v860 = vld [vmem:[#allocation8 + $0xd] sm:$0x1]
    %v861 = vlaneseq
    %v862 = vshrl.u32 %v861, 7
    %v863 = vsub.s32 0, %v862
    %v864 = vrot.slane %v860, %v863
    %v881 = vunpack.c.l.b16 %v843
    %v882 = vunpack.c.l.b16 %v844
    %v883 = vunpack.c.l.b16 %v845
    %v884 = vunpack.c.l.b16 %v846
    %v885 = vunpack.c.l.b16 %v847
    %v886 = vunpack.c.l.b16 %v848
    %v887 = vunpack.c.l.b16 %v849
    %v888 = vunpack.c.l.b16 %v850
    %v889 = vunpack.c.l.b16 %v851
    %v890 = vunpack.c.l.b16 %v852
    %v891 = vunpack.c.l.b16 %v853
    %v892 = vunpack.c.l.b16 %v854
    %v893 = vunpack.c.l.b16 %v855
    %v894 = vunpack.c.l.b16 %v856
    %v895 = vunpack.c.l.b16 %v857
    %v896 = vunpack.c.l.b16 %v858
    %v897 = vpack.c.b16 %v882, %v881
    %v898 = vpack.c.b16 %v884, %v883
    %v899 = vpack.c.b16 %v886, %v885
    %v900 = vpack.c.b16 %v888, %v887
    %v901 = vpack.c.b16 %v890, %v889
    %v902 = vpack.c.b16 %v892, %v891
    %v903 = vpack.c.b16 %v894, %v893
    %v904 = vpack.c.b16 %v896, %v895
    %913 = vmatprep.subr.bf16.mxu0 0
    %914 = vmatpush1.bf16.msra.mxu0 %v897
    %915 = vmatprep.subr.bf16.mxu0 0
    %916 = vmatpush1.bf16.msra.mxu0 %v898
    %917 = vmatprep.subr.bf16.mxu0 0
    %918 = vmatpush1.bf16.msra.mxu0 %v899
    %919 = vmatprep.subr.bf16.mxu0 0
    %920 = vmatpush1.bf16.msra.mxu0 %v900
    %921 = vmatprep.subr.bf16.mxu0 0
    %922 = vmatpush1.bf16.msra.mxu0 %v901
    %923 = vmatprep.subr.bf16.mxu0 0
    %924 = vmatpush1.bf16.msra.mxu0 %v902
    %925 = vmatprep.subr.bf16.mxu0 0
    %926 = vmatpush1.bf16.msra.mxu0 %v903
    %927 = vmatprep.subr.bf16.mxu0 0
    %928 = vmatpush1.bf16.msra.mxu0 %v904
    %929 = vmatprep.subr.bf16.mxu0 0
    %930 = vmatpush1.bf16.msra.mxu0 0
    %931 = vmatprep.subr.bf16.mxu0 0
    %932 = vmatpush1.bf16.msra.mxu0 0
    %933 = vmatprep.subr.bf16.mxu0 0
    %934 = vmatpush1.bf16.msra.mxu0 0
    %935 = vmatprep.subr.bf16.mxu0 0
    %936 = vmatpush1.bf16.msra.mxu0 0
    %937 = vmatprep.subr.bf16.mxu0 0
    %938 = vmatpush1.bf16.msra.mxu0 0
    %939 = vmatprep.subr.bf16.mxu0 0
    %940 = vmatpush1.bf16.msra.mxu0 0
    %941 = vmatprep.subr.bf16.mxu0 0
    %942 = vmatpush1.bf16.msra.mxu0 0
    %943 = vmatprep.subr.bf16.mxu0 0
    %944 = vmatpush1.bf16.msra.mxu0 0
    %945 = vmatprep.mubr.bf16.mxu0 0
    %946 = vmatmul.mubr.bf16.gmra.mrb[0].mxu0 %v859
    %v947 = vpop.f32.mrb[0].mxu0
    %v948 = vadd.f32 %v864, %v947
    %v949 = vpop.f32.mrb[0].mxu0
    %v950 = vpop.f32.mrb[0].mxu0
    %v951 = vpop.f32.mrb[0].mxu0
    %952 = vdwg.mxu0
    %vm953 = vcmp.gt.f32.partialorder %v948, 0.0
    %v954 = vmul.f32 %v948, 0.1
    %v955 = vsel %vm953, %v948, %v954
    %s956 = scalar_lea.vmem [#allocation7], 384
    %v957 = vld [vmem:[%s956] sm:$0xf]
    %v958 = vld [vmem:[%s956 + $0x4] sm:$0xf]
    %v959 = vld [vmem:[%s956 + $0x8] sm:$0xf]
    %v960 = vld [vmem:[%s956 + $0xc] sm:$0xf]
    %v961 = vld [vmem:[%s956 + $0x10] sm:$0xf]
    %v962 = vld [vmem:[%s956 + $0x14] sm:$0xf]
    %v963 = vld [vmem:[%s956 + $0x18] sm:$0xf]
    %v964 = vld [vmem:[%s956 + $0x1c] sm:$0xf]
    %v965 = vld [vmem:[%s956 + $0x20] sm:$0xf]
    %v966 = vld [vmem:[%s956 + $0x24] sm:$0xf]
    %v967 = vld [vmem:[%s956 + $0x28] sm:$0xf]
    %v968 = vld [vmem:[%s956 + $0x2c] sm:$0xf]
    %v969 = vld [vmem:[%s956 + $0x30] sm:$0xf]
    %v970 = vld [vmem:[%s956 + $0x34] sm:$0xf]
    %v971 = vld [vmem:[%s956 + $0x38] sm:$0xf]
    %v972 = vld [vmem:[%s956 + $0x3c] sm:$0xf]
    %v973 = vpack.c.bf16 %v955, %v955
    %v974 = vld [vmem:[#allocation8 + $0xe] sm:$0x1]
    %v975 = vlaneseq
    %v976 = vshrl.u32 %v975, 7
    %v977 = vsub.s32 0, %v976
    %v978 = vrot.slane %v974, %v977
    %v995 = vunpack.c.l.b16 %v957
    %v996 = vunpack.c.l.b16 %v958
    %v997 = vunpack.c.l.b16 %v959
    %v998 = vunpack.c.l.b16 %v960
    %v999 = vunpack.c.l.b16 %v961
    %v1000 = vunpack.c.l.b16 %v962
    %v1001 = vunpack.c.l.b16 %v963
    %v1002 = vunpack.c.l.b16 %v964
    %v1003 = vunpack.c.l.b16 %v965
    %v1004 = vunpack.c.l.b16 %v966
    %v1005 = vunpack.c.l.b16 %v967
    %v1006 = vunpack.c.l.b16 %v968
    %v1007 = vunpack.c.l.b16 %v969
    %v1008 = vunpack.c.l.b16 %v970
    %v1009 = vunpack.c.l.b16 %v971
    %v1010 = vunpack.c.l.b16 %v972
    %v1011 = vpack.c.b16 %v996, %v995
    %v1012 = vpack.c.b16 %v998, %v997
    %v1013 = vpack.c.b16 %v1000, %v999
    %v1014 = vpack.c.b16 %v1002, %v1001
    %v1015 = vpack.c.b16 %v1004, %v1003
    %v1016 = vpack.c.b16 %v1006, %v1005
    %v1017 = vpack.c.b16 %v1008, %v1007
    %v1018 = vpack.c.b16 %v1010, %v1009
    %1027 = vmatprep.subr.bf16.mxu0 0
    %1028 = vmatpush1.bf16.msra.mxu0 %v1011
    %1029 = vmatprep.subr.bf16.mxu0 0
    %1030 = vmatpush1.bf16.msra.mxu0 %v1012
    %1031 = vmatprep.subr.bf16.mxu0 0
    %1032 = vmatpush1.bf16.msra.mxu0 %v1013
    %1033 = vmatprep.subr.bf16.mxu0 0
    %1034 = vmatpush1.bf16.msra.mxu0 %v1014
    %1035 = vmatprep.subr.bf16.mxu0 0
    %1036 = vmatpush1.bf16.msra.mxu0 %v1015
    %1037 = vmatprep.subr.bf16.mxu0 0
    %1038 = vmatpush1.bf16.msra.mxu0 %v1016
    %1039 = vmatprep.subr.bf16.mxu0 0
    %1040 = vmatpush1.bf16.msra.mxu0 %v1017
    %1041 = vmatprep.subr.bf16.mxu0 0
    %1042 = vmatpush1.bf16.msra.mxu0 %v1018
    %1043 = vmatprep.subr.bf16.mxu0 0
    %1044 = vmatpush1.bf16.msra.mxu0 0
    %1045 = vmatprep.subr.bf16.mxu0 0
    %1046 = vmatpush1.bf16.msra.mxu0 0
    %1047 = vmatprep.subr.bf16.mxu0 0
    %1048 = vmatpush1.bf16.msra.mxu0 0
    %1049 = vmatprep.subr.bf16.mxu0 0
    %1050 = vmatpush1.bf16.msra.mxu0 0
    %1051 = vmatprep.subr.bf16.mxu0 0
    %1052 = vmatpush1.bf16.msra.mxu0 0
    %1053 = vmatprep.subr.bf16.mxu0 0
    %1054 = vmatpush1.bf16.msra.mxu0 0
    %1055 = vmatprep.subr.bf16.mxu0 0
    %1056 = vmatpush1.bf16.msra.mxu0 0
    %1057 = vmatprep.subr.bf16.mxu0 0
    %1058 = vmatpush1.bf16.msra.mxu0 0
    %1059 = vmatprep.mubr.bf16.mxu0 0
    %1060 = vmatmul.mubr.bf16.gmra.mrb[0].mxu0 %v973
    %v1061 = vpop.f32.mrb[0].mxu0
    %v1062 = vadd.f32 %v978, %v1061
    %v1063 = vpop.f32.mrb[0].mxu0
    %v1064 = vpop.f32.mrb[0].mxu0
    %v1065 = vpop.f32.mrb[0].mxu0
    %1066 = vdwg.mxu0
    %vm1067 = vcmp.gt.f32.partialorder %v1062, 0.0
    %v1068 = vmul.f32 %v1062, 0.1
    %v1069 = vsel %vm1067, %v1062, %v1068
    %v1070 = vadd.f32 %v1069, %v841
    %vm1071 = vcmp.gt.f32.partialorder %v1070, 0.0
    %v1072 = vmul.f32 %v1070, 0.1
    %v1073 = vsel %vm1071, %v1070, %v1072
    %v1074 = vld [vmem:[#allocation8 + $0xf] sm:$0x1]
    %v1075 = vld [vmem:[#allocation8 + $0x10] sm:$0x1]
    %1076 = vadd.xlane.f32.xlu0 %v1073
    %v1077 = vpop.xlane.xlu0 %1076
    %v1078 = vmul.f32 %v1077, %v303
    %v1079 = vmul.f32 %v1073, %v1073
    %1080 = vadd.xlane.f32.xlu0 %v1079
    %v1081 = vpop.xlane.xlu0 %1080
    %v1082 = vmul.f32 %v1081, %v303
    %v1083 = vmul.f32 %v1078, %v1078
    %v1084 = vsub.f32 %v1082, %v1083
    %v1085 = vmax.f32 %v1084, 0.0
    %v1086 = vsub.f32 %v1073, %v1078
    %v1087 = vadd.f32 %v1085, 1e-05
    %v1088 = vrsqrt.pop %v1087
    %v1089 = vmul.f32 %v1086, %v1088
    %v1090 = vlaneseq
    %v1091 = vshrl.u32 %v1090, 7
    %v1092 = vsub.s32 0, %v1091
    %v1093 = vrot.slane %v1074, %v1092
    %v1094 = vmul.f32 %v1089, %v1093
    %v1095 = vlaneseq
    %v1096 = vshrl.u32 %v1095, 7
    %v1097 = vsub.s32 0, %v1096
    %v1098 = vrot.slane %v1075, %v1097
    %v1099 = vadd.f32 %v1094, %v1098
    %s1100 = scalar_lea.vmem [#allocation7], 448
    %v1101 = vld [vmem:[%s1100] sm:$0xf]
    %v1102 = vld [vmem:[%s1100 + $0x4] sm:$0xf]
    %v1103 = vld [vmem:[%s1100 + $0x8] sm:$0xf]
    %v1104 = vld [vmem:[%s1100 + $0xc] sm:$0xf]
    %v1105 = vld [vmem:[%s1100 + $0x10] sm:$0xf]
    %v1106 = vld [vmem:[%s1100 + $0x14] sm:$0xf]
    %v1107 = vld [vmem:[%s1100 + $0x18] sm:$0xf]
    %v1108 = vld [vmem:[%s1100 + $0x1c] sm:$0xf]
    %v1109 = vld [vmem:[%s1100 + $0x20] sm:$0xf]
    %v1110 = vld [vmem:[%s1100 + $0x24] sm:$0xf]
    %v1111 = vld [vmem:[%s1100 + $0x28] sm:$0xf]
    %v1112 = vld [vmem:[%s1100 + $0x2c] sm:$0xf]
    %v1113 = vld [vmem:[%s1100 + $0x30] sm:$0xf]
    %v1114 = vld [vmem:[%s1100 + $0x34] sm:$0xf]
    %v1115 = vld [vmem:[%s1100 + $0x38] sm:$0xf]
    %v1116 = vld [vmem:[%s1100 + $0x3c] sm:$0xf]
    %v1117 = vpack.c.bf16 %v1099, %v1099
    %v1118 = vld [vmem:[#allocation8 + $0x11] sm:$0x1]
    %v1119 = vlaneseq
    %v1120 = vshrl.u32 %v1119, 7
    %v1121 = vsub.s32 0, %v1120
    %v1122 = vrot.slane %v1118, %v1121
    %v1139 = vunpack.c.l.b16 %v1101
    %v1140 = vunpack.c.l.b16 %v1102
    %v1141 = vunpack.c.l.b16 %v1103
    %v1142 = vunpack.c.l.b16 %v1104
    %v1143 = vunpack.c.l.b16 %v1105
    %v1144 = vunpack.c.l.b16 %v1106
    %v1145 = vunpack.c.l.b16 %v1107
    %v1146 = vunpack.c.l.b16 %v1108
    %v1147 = vunpack.c.l.b16 %v1109
    %v1148 = vunpack.c.l.b16 %v1110
    %v1149 = vunpack.c.l.b16 %v1111
    %v1150 = vunpack.c.l.b16 %v1112
    %v1151 = vunpack.c.l.b16 %v1113
    %v1152 = vunpack.c.l.b16 %v1114
    %v1153 = vunpack.c.l.b16 %v1115
    %v1154 = vunpack.c.l.b16 %v1116
    %v1155 = vpack.c.b16 %v1140, %v1139
    %v1156 = vpack.c.b16 %v1142, %v1141
    %v1157 = vpack.c.b16 %v1144, %v1143
    %v1158 = vpack.c.b16 %v1146, %v1145
    %v1159 = vpack.c.b16 %v1148, %v1147
    %v1160 = vpack.c.b16 %v1150, %v1149
    %v1161 = vpack.c.b16 %v1152, %v1151
    %v1162 = vpack.c.b16 %v1154, %v1153
    %1171 = vmatprep.subr.bf16.mxu0 0
    %1172 = vmatpush1.bf16.msra.mxu0 %v1155
    %1173 = vmatprep.subr.bf16.mxu0 0
    %1174 = vmatpush1.bf16.msra.mxu0 %v1156
    %1175 = vmatprep.subr.bf16.mxu0 0
    %1176 = vmatpush1.bf16.msra.mxu0 %v1157
    %1177 = vmatprep.subr.bf16.mxu0 0
    %1178 = vmatpush1.bf16.msra.mxu0 %v1158
    %1179 = vmatprep.subr.bf16.mxu0 0
    %1180 = vmatpush1.bf16.msra.mxu0 %v1159
    %1181 = vmatprep.subr.bf16.mxu0 0
    %1182 = vmatpush1.bf16.msra.mxu0 %v1160
    %1183 = vmatprep.subr.bf16.mxu0 0
    %1184 = vmatpush1.bf16.msra.mxu0 %v1161
    %1185 = vmatprep.subr.bf16.mxu0 0
    %1186 = vmatpush1.bf16.msra.mxu0 %v1162
    %1187 = vmatprep.subr.bf16.mxu0 0
    %1188 = vmatpush1.bf16.msra.mxu0 0
    %1189 = vmatprep.subr.bf16.mxu0 0
    %1190 = vmatpush1.bf16.msra.mxu0 0
    %1191 = vmatprep.subr.bf16.mxu0 0
    %1192 = vmatpush1.bf16.msra.mxu0 0
    %1193 = vmatprep.subr.bf16.mxu0 0
    %1194 = vmatpush1.bf16.msra.mxu0 0
    %1195 = vmatprep.subr.bf16.mxu0 0
    %1196 = vmatpush1.bf16.msra.mxu0 0
    %1197 = vmatprep.subr.bf16.mxu0 0
    %1198 = vmatpush1.bf16.msra.mxu0 0
    %1199 = vmatprep.subr.bf16.mxu0 0
    %1200 = vmatpush1.bf16.msra.mxu0 0
    %1201 = vmatprep.subr.bf16.mxu0 0
    %1202 = vmatpush1.bf16.msra.mxu0 0
    %1203 = vmatprep.mubr.bf16.mxu0 0
    %1204 = vmatmul.mubr.bf16.gmra.mrb[0].mxu0 %v1117
    %v1205 = vpop.f32.mrb[0].mxu0
    %v1206 = vadd.f32 %v1122, %v1205
    %v1207 = vpop.f32.mrb[0].mxu0
    %v1208 = vpop.f32.mrb[0].mxu0
    %v1209 = vpop.f32.mrb[0].mxu0
    %1210 = vdwg.mxu0
    %1211 = vmax.xlane.f32.xlu0 %v1206
    %v1212 = vpop.xlane.xlu0 %1211
    %v1213 = vsub.f32 %v1206, %v1212
    %v1214 = vmul.f32 %v1213, 1.442695
    %v1215 = vpow.pop %v1214
    %1216 = vadd.xlane.f32.xlu0 %v1215
    %v1217 = vpop.xlane.xlu0 %1216
    %v1218 = vrcp.pop %v1217
    %v1219 = vmul.f32 %v1215, %v1218
    %vm1220 = vcmask 64512
    %1221 = vst.msk [vmem:[#allocation10] sm:$0xff] %vm1220, %v1219
    // Predicated region
    $region34: #{tpu_custom_call.1} parent=1 // pred_check
      _
    $region35: #{tpu_custom_call.1} parent=1 // pred_check_branch
      %1223 = sbr.rel (0) target = $region37
    $region36: #{tpu_custom_call.1} parent=1 // pred_region
      %s1225 = ssub.s32 128, 128
      %1226 = vsyncadd [#allocation4], %s1225
      %s1228 = sshll.u32 [#allocation10], 4
      %s1229 = int_to_ptr.vmem [resolvable:$true] %s1228
      %1231 = dma.vmem_to_hbm [thread:$0]  %s1229, 128, %s4, [#allocation4]
    $region37: #{tpu_custom_call.1} parent=1 // pred_fallthru
      _
    // Predicated region
    $region38: #{tpu_custom_call.1} parent=1 // pred_check
      _
    $region39: #{tpu_custom_call.1} parent=1 // pred_check_branch
      %1233 = sbr.rel (0) target = $region41
    $region40: #{tpu_custom_call.1} parent=1 // pred_region
      %1234 = dma.done [#allocation4], 128
    $region41: #{tpu_custom_call.1} parent=1 // pred_fallthru
      _
    %1235 = vsyncpa [#allocation3], 1
    %1236 = vsyncpa [#allocation6], 1
    %1237 = vsyncpa [#allocation9], 1
    %1238 = vsyncpa [#allocation4], 1

</llo_original>
